<compile_context>
chip_gen: v5e
topology: v5e:2x2
jax: 0.10.0
libtpu: 0.0.40
codegen_flags: <defaults>
</compile_context>

<pallas_src>
import jax
import jax.numpy as jnp
from jax.experimental import pallas as pl
from jax.experimental.pallas import tpu as pltpu

IN_FEATURES = 28 * 28   # 784, fixed by the module
HIDDEN_DEFAULT = 512    # `n` (module constructor default)
HIDDEN2 = 512           # fixed by the module
OUT_FEATURES = 10       # fixed by the module
OUT_PAD = 128           # lane-dense padded width for the final layer
LANE = 128
MAX_TILE_B = 256        # batch rows per grid step for large batches


def _round_up(x, m):
    return ((x + m - 1) // m) * m


def _mlp_kernel(x_ref, w1_ref, b1_ref, w2_ref, b2_ref, w3_ref, b3_ref, out_ref):
    # One (tile_b, 784) batch tile per grid step; weights stay resident in VMEM.
    x = x_ref[...]                                                   # (tile_b, 784) f32

    # Linear(784, n) + ReLU   (MXU matmul, f32 accumulation)
    h1 = jnp.dot(x, w1_ref[...], preferred_element_type=jnp.float32) + b1_ref[...]
    h1 = jnp.maximum(h1, 0.0)

    # Linear(n, 512) + ReLU
    h2 = jnp.dot(h1, w2_ref[...], preferred_element_type=jnp.float32) + b2_ref[...]
    h2 = jnp.maximum(h2, 0.0)

    # Linear(512, 10) padded to 128 output lanes (no activation — logits)
    out_ref[...] = (
        jnp.dot(h2, w3_ref[...], preferred_element_type=jnp.float32) + b3_ref[...]
    ).astype(out_ref.dtype)


def prepare_params(params):
    """One-time conversion of PyTorch-layout params to kernel-ready layout.

    PyTorch Linear stores W as (out, in); the kernel computes x @ W^T, so we
    pre-transpose to (in, out). The first hidden dim is zero-padded up to a
    multiple of 128 lanes and the final layer is zero-padded to 128 lanes —
    both are exact no-ops on the computed logits.
    """
    w1, b1, w2, b2, w3, b3 = params
    n = w1.shape[0]
    n_pad = _round_up(max(n, LANE), LANE)

    w1t = jnp.zeros((IN_FEATURES, n_pad), jnp.float32).at[:, :n].set(
        jnp.asarray(w1, jnp.float32).T)                              # (784, n_pad)
    b1r = jnp.zeros((1, n_pad), jnp.float32).at[0, :n].set(
        jnp.asarray(b1, jnp.float32))                                # (1, n_pad)
    w2t = jnp.zeros((n_pad, HIDDEN2), jnp.float32).at[:n, :].set(
        jnp.asarray(w2, jnp.float32).T)                              # (n_pad, 512)
    b2r = jnp.asarray(b2, jnp.float32).reshape(1, HIDDEN2)           # (1, 512)
    w3t = jnp.zeros((HIDDEN2, OUT_PAD), jnp.float32).at[:, :OUT_FEATURES].set(
        jnp.asarray(w3, jnp.float32).T)                              # (512, 128)
    b3r = jnp.zeros((1, OUT_PAD), jnp.float32).at[0, :OUT_FEATURES].set(
        jnp.asarray(b3, jnp.float32))                                # (1, 128)
    return (w1t, b1r, w2t, b2r, w3t, b3r)


def mlp_forward(x_nchw, prepared):
    """x_nchw: (B, 1, 28, 28) float32; returns logits (B, 10) float32."""
    b = x_nchw.shape[0]
    x2d = x_nchw.reshape(b, -1)                                      # nn.Flatten
    assert x2d.shape[1] == IN_FEATURES

    w1t, b1r, w2t, b2r, w3t, b3r = prepared
    n_pad = w1t.shape[1]

    # Adaptive batch tile: one grid step for small batches, 256-row tiles for
    # large ones. Tile height is always a multiple of 8 (sublane alignment).
    tile_b = min(MAX_TILE_B, _round_up(b, 8))
    b_pad = _round_up(b, tile_b)
    if b_pad != b:
        x2d = jnp.pad(x2d, ((0, b_pad - b), (0, 0)))
    n_tiles = b_pad // tile_b

    const = lambda i: (0, 0)                                         # resident weights
    out_padded = pl.pallas_call(
        _mlp_kernel,
        out_shape=jax.ShapeDtypeStruct((b_pad, OUT_PAD), jnp.float32),
        grid=(n_tiles,),
        in_specs=[
            pl.BlockSpec((tile_b, IN_FEATURES), lambda i: (i, 0)),   # x tile
            pl.BlockSpec((IN_FEATURES, n_pad), const),               # w1^T (padded)
            pl.BlockSpec((1, n_pad), const),                         # b1   (padded)
            pl.BlockSpec((n_pad, HIDDEN2), const),                   # w2^T (padded)
            pl.BlockSpec((1, HIDDEN2), const),                       # b2
            pl.BlockSpec((HIDDEN2, OUT_PAD), const),                 # w3^T (padded)
            pl.BlockSpec((1, OUT_PAD), const),                       # b3   (padded)
        ],
        out_specs=pl.BlockSpec((tile_b, OUT_PAD), lambda i: (i, 0)),
        compiler_params=pltpu.CompilerParams(
            dimension_semantics=("parallel",),                       # megacore on v7x
        ),
    )(x2d, w1t, b1r, w2t, b2r, w3t, b3r)

    return out_padded[:b, :OUT_FEATURES]


def init_params(key, n=HIDDEN_DEFAULT):
    """Deterministic synthetic params with PyTorch Linear shapes (out, in)."""
    ks = jax.random.split(key, 6)

    def uniform(k, shape, fan_in):
        bound = 1.0 / jnp.sqrt(fan_in)
        return jax.random.uniform(k, shape, jnp.float32, -bound, bound)

    w1 = uniform(ks[0], (n, IN_FEATURES), IN_FEATURES)
    b1 = uniform(ks[1], (n,), IN_FEATURES)
    w2 = uniform(ks[2], (HIDDEN2, n), n)
    b2 = uniform(ks[3], (HIDDEN2,), n)
    w3 = uniform(ks[4], (OUT_FEATURES, HIDDEN2), HIDDEN2)
    b3 = uniform(ks[5], (OUT_FEATURES,), HIDDEN2)
    return (w1, b1, w2, b2, w3, b3)


def _reference(x_nchw, params):
    w1, b1, w2, b2, w3, b3 = params
    x = x_nchw.reshape(x_nchw.shape[0], -1)
    h1 = jnp.maximum(x @ w1.T + b1, 0.0)
    h2 = jnp.maximum(h1 @ w2.T + b2, 0.0)
    return h2 @ w3.T + b3


if __name__ == "__main__":
    key = jax.random.PRNGKey(0)
    k_x, k_p = jax.random.split(key)

    batch = 8
    x = jax.random.normal(k_x, (batch, 1, 28, 28), jnp.float32)      # NCHW, MNIST-like
    params = init_params(k_p, n=HIDDEN_DEFAULT)                      # n=512 (module default)
    prepared = prepare_params(params)                                # one-time layout prep

    logits = mlp_forward(x, prepared)
    logits = jax.block_until_ready(logits)

    ref = _reference(x, params)
    assert logits.shape == (batch, OUT_FEATURES)
    assert jnp.allclose(logits, ref, atol=1e-4, rtol=1e-4)

    print("KERNEL_OK")
</pallas_src>

<mosaic_0001>
module attributes {stable_mosaic.version = 11 : i64} {
  func.func @_mlp_kernel(%arg0: i32, %arg1: memref<8x784xf32, #tpu.memory_space<vmem>>, %arg2: memref<784x512xf32, #tpu.memory_space<vmem>>, %arg3: memref<1x512xf32, #tpu.memory_space<vmem>>, %arg4: memref<512x512xf32, #tpu.memory_space<vmem>>, %arg5: memref<1x512xf32, #tpu.memory_space<vmem>>, %arg6: memref<512x128xf32, #tpu.memory_space<vmem>>, %arg7: memref<1x128xf32, #tpu.memory_space<vmem>>, %arg8: memref<8x128xf32, #tpu.memory_space<vmem>>) attributes {dimension_semantics = [#tpu.dimension_semantics<parallel>], iteration_bounds = array<i64: 1>, scalar_prefetch = 0 : i64, scratch_operands = 0 : i64, tpu.core_type = #tpu.core_type<tc>, window_params = [{transform_indices = @transform_0, window_bounds = array<i64: 8, 784>}, {pipeline_mode = #tpu.pipeline_mode<synchronous>, transform_indices = @transform_1, window_bounds = array<i64: 784, 512>}, {pipeline_mode = #tpu.pipeline_mode<synchronous>, transform_indices = @transform_2, window_bounds = array<i64: 1, 512>}, {pipeline_mode = #tpu.pipeline_mode<synchronous>, transform_indices = @transform_3, window_bounds = array<i64: 512, 512>}, {pipeline_mode = #tpu.pipeline_mode<synchronous>, transform_indices = @transform_4, window_bounds = array<i64: 1, 512>}, {pipeline_mode = #tpu.pipeline_mode<synchronous>, transform_indices = @transform_5, window_bounds = array<i64: 512, 128>}, {pipeline_mode = #tpu.pipeline_mode<synchronous>, transform_indices = @transform_6, window_bounds = array<i64: 1, 128>}, {transform_indices = @transform_7, window_bounds = array<i64: 8, 128>}]} {
    %c0 = arith.constant 0 : index
    %c0_0 = arith.constant 0 : index
    %0 = vector.load %arg1[%c0, %c0_0] : memref<8x784xf32, #tpu.memory_space<vmem>>, vector<8x784xf32>
    %c0_1 = arith.constant 0 : index
    %c0_2 = arith.constant 0 : index
    %1 = vector.load %arg2[%c0_1, %c0_2] : memref<784x512xf32, #tpu.memory_space<vmem>>, vector<784x512xf32>
    %cst = arith.constant dense<0.000000e+00> : vector<8x512xf32>
    %2 = tpu.matmul %0, %1, %cst {dimension_numbers = #tpu.dot_dimension_numbers<[1], [0], [0], [1], [0, 0, 1, 1], [], []>} : vector<8x784xf32>, vector<784x512xf32>, vector<8x512xf32> -> vector<8x512xf32>
    %c0_3 = arith.constant 0 : index
    %c0_4 = arith.constant 0 : index
    %3 = vector.load %arg3[%c0_3, %c0_4] : memref<1x512xf32, #tpu.memory_space<vmem>>, vector<1x512xf32>
    %4 = vector.broadcast %3 : vector<1x512xf32> to vector<8x512xf32>
    %5 = arith.addf %2, %4 : vector<8x512xf32>
    %cst_5 = arith.constant 0.000000e+00 : f32
    %6 = vector.broadcast %cst_5 : f32 to vector<8x512xf32>
    %7 = arith.maximumf %5, %6 : vector<8x512xf32>
    %c0_6 = arith.constant 0 : index
    %c0_7 = arith.constant 0 : index
    %8 = vector.load %arg4[%c0_6, %c0_7] : memref<512x512xf32, #tpu.memory_space<vmem>>, vector<512x512xf32>
    %cst_8 = arith.constant dense<0.000000e+00> : vector<8x512xf32>
    %9 = tpu.matmul %7, %8, %cst_8 {dimension_numbers = #tpu.dot_dimension_numbers<[1], [0], [0], [1], [0, 0, 1, 1], [], []>} : vector<8x512xf32>, vector<512x512xf32>, vector<8x512xf32> -> vector<8x512xf32>
    %c0_9 = arith.constant 0 : index
    %c0_10 = arith.constant 0 : index
    %10 = vector.load %arg5[%c0_9, %c0_10] : memref<1x512xf32, #tpu.memory_space<vmem>>, vector<1x512xf32>
    %11 = vector.broadcast %10 : vector<1x512xf32> to vector<8x512xf32>
    %12 = arith.addf %9, %11 : vector<8x512xf32>
    %cst_11 = arith.constant 0.000000e+00 : f32
    %13 = vector.broadcast %cst_11 : f32 to vector<8x512xf32>
    %14 = arith.maximumf %12, %13 : vector<8x512xf32>
    %c0_12 = arith.constant 0 : index
    %c0_13 = arith.constant 0 : index
    %15 = vector.load %arg6[%c0_12, %c0_13] : memref<512x128xf32, #tpu.memory_space<vmem>>, vector<512x128xf32>
    %cst_14 = arith.constant dense<0.000000e+00> : vector<8x128xf32>
    %16 = tpu.matmul %14, %15, %cst_14 {dimension_numbers = #tpu.dot_dimension_numbers<[1], [0], [0], [1], [0, 0, 1, 1], [], []>} : vector<8x512xf32>, vector<512x128xf32>, vector<8x128xf32> -> vector<8x128xf32>
    %c0_15 = arith.constant 0 : index
    %c0_16 = arith.constant 0 : index
    %17 = vector.load %arg7[%c0_15, %c0_16] : memref<1x128xf32, #tpu.memory_space<vmem>>, vector<1x128xf32>
    %18 = vector.broadcast %17 : vector<1x128xf32> to vector<8x128xf32>
    %19 = arith.addf %16, %18 : vector<8x128xf32>
    %c0_17 = arith.constant 0 : index
    %c0_18 = arith.constant 0 : index
    %20 = vector.load %arg8[%c0_17, %c0_18] : memref<8x128xf32, #tpu.memory_space<vmem>>, vector<8x128xf32>
    tpu.vector_store %arg8[%c0_17, %c0_18], %19 {strides = array<i32>} : memref<8x128xf32, #tpu.memory_space<vmem>>, vector<8x128xf32>,
    return
  }
  func.func @transform_0(%arg0: i32) -> (i32, i32) {
    %c0_i32 = arith.constant 0 : i32
    %c0_i32_0 = arith.constant 0 : i32
    return %arg0, %c0_i32 : i32, i32
  }
  func.func @transform_1(%arg0: i32) -> (i32, i32) {
    %c0_i32 = arith.constant 0 : i32
    %c0_i32_0 = arith.constant 0 : i32
    %c0_i32_1 = arith.constant 0 : i32
    return %c0_i32, %c0_i32_0 : i32, i32
  }
  func.func @transform_2(%arg0: i32) -> (i32, i32) {
    %c0_i32 = arith.constant 0 : i32
    %c0_i32_0 = arith.constant 0 : i32
    %c0_i32_1 = arith.constant 0 : i32
    return %c0_i32, %c0_i32_0 : i32, i32
  }
  func.func @transform_3(%arg0: i32) -> (i32, i32) {
    %c0_i32 = arith.constant 0 : i32
    %c0_i32_0 = arith.constant 0 : i32
    %c0_i32_1 = arith.constant 0 : i32
    return %c0_i32, %c0_i32_0 : i32, i32
  }
  func.func @transform_4(%arg0: i32) -> (i32, i32) {
    %c0_i32 = arith.constant 0 : i32
    %c0_i32_0 = arith.constant 0 : i32
    %c0_i32_1 = arith.constant 0 : i32
    return %c0_i32, %c0_i32_0 : i32, i32
  }
  func.func @transform_5(%arg0: i32) -> (i32, i32) {
    %c0_i32 = arith.constant 0 : i32
    %c0_i32_0 = arith.constant 0 : i32
    %c0_i32_1 = arith.constant 0 : i32
    return %c0_i32, %c0_i32_0 : i32, i32
  }
  func.func @transform_6(%arg0: i32) -> (i32, i32) {
    %c0_i32 = arith.constant 0 : i32
    %c0_i32_0 = arith.constant 0 : i32
    %c0_i32_1 = arith.constant 0 : i32
    return %c0_i32, %c0_i32_0 : i32, i32
  }
  func.func @transform_7(%arg0: i32) -> (i32, i32) {
    %c0_i32 = arith.constant 0 : i32
    %c0_i32_0 = arith.constant 0 : i32
    return %arg0, %c0_i32 : i32, i32
  }
}

</mosaic_0001>

<llo_original>
// kernel: tpu_custom_call.1
$region0: #{tpu_custom_call.1}
  #allocation0 [shape = 'u32[]', space=smem, size = 0x4, offset = 0x4, fixed_abs, tag = 'smem constant byte address 0x4 - core index']
  #allocation1 [shape = 'u32[72,128]{1,0:T(1,128)}', space=vmem, size = 0x9000, scoped, tag = 'internal scratch']
  %s0 = inlined_call_operand.hbm [shape: f32[8,784], index: 0, kind: input, shape index: {}]
  %s1 = inlined_call_operand.hbm [shape: f32[784,512], index: 1, kind: input, shape index: {}]
  %s2 = inlined_call_operand.hbm [shape: f32[1,512], index: 2, kind: input, shape index: {}]
  %s3 = inlined_call_operand.hbm [shape: f32[512,512], index: 3, kind: input, shape index: {}]
  %s4 = inlined_call_operand.hbm [shape: f32[1,512], index: 4, kind: input, shape index: {}]
  %s5 = inlined_call_operand.hbm [shape: f32[512,128], index: 5, kind: input, shape index: {}]
  %s6 = inlined_call_operand.hbm [shape: f32[1,128], index: 6, kind: input, shape index: {}]
  %s7 = inlined_call_operand.hbm [shape: f32[8,128], index: 7, kind: output, shape index: {}]
  %s8 = sld [smem:[#allocation0]]
  $region66: #{tpu_custom_call.1} parent=0
    _
  %s10 = ssub.s32 1, %s8
  %s11 = scalar_select 0, %s10, %s8
  $region1: #{tpu_custom_call.1} parent=0
    #allocation2 [shape = 'u8[28672]{0}', space=vmem, size = 0x7000, scoped, tag = 'input window, operand 0, single buffered']
    #allocation3 [shape = 's32[1]{0}', space=sflag, size = 0x4, scoped, tag = 'scoped memory for tpu_custom_call.1']
    #allocation4 [shape = 's32[1]{0}', space=sflag, size = 0x4, scoped, tag = 'scoped memory for tpu_custom_call.1']
    #allocation5 [shape = 'u8[1605632]{0}', space=vmem, size = 0x188000, scoped, tag = 'input window, operand 1, single buffered']
    #allocation6 [shape = 's32[1]{0}', space=sflag, size = 0x4, scoped, tag = 'scoped memory for tpu_custom_call.1']
    #allocation7 [shape = 'u8[2048]{0}', space=vmem, size = 0x800, scoped, tag = 'input window, operand 2, single buffered']
    #allocation8 [shape = 'u8[1048576]{0}', space=vmem, size = 0x100000, scoped, tag = 'input window, operand 3, single buffered']
    #allocation9 [shape = 's32[1]{0}', space=sflag, size = 0x4, scoped, tag = 'scoped memory for tpu_custom_call.1']
    #allocation10 [shape = 'u8[2048]{0}', space=vmem, size = 0x800, scoped, tag = 'input window, operand 4, single buffered']
    #allocation11 [shape = 'u8[262144]{0}', space=vmem, size = 0x40000, scoped, tag = 'input window, operand 5, single buffered']
    #allocation12 [shape = 's32[1]{0}', space=sflag, size = 0x4, scoped, tag = 'scoped memory for tpu_custom_call.1']
    #allocation13 [shape = 'u8[512]{0}', space=vmem, size = 0x400, scoped, tag = 'input window, operand 6, single buffered']
    #allocation14 [shape = 'u8[4096]{0}', space=vmem, size = 0x1000, scoped, tag = 'output window, operand 0, single buffered']
    %12 = vsyncpa [#allocation3], 0
    %13 = vsyncpa [#allocation6], 0
    %14 = vsyncpa [#allocation9], 0
    %15 = vsyncpa [#allocation12], 0
    %16 = vsyncpa [#allocation4], 0
    // Predicated region
    $region2: #{tpu_custom_call.1} parent=1 // pred_check
      _
    $region3: #{tpu_custom_call.1} parent=1 // pred_check_branch
      %18 = sbr.rel (0) target = $region5
    $region4: #{tpu_custom_call.1} parent=1 // pred_region
      %20 = vsyncadd [#allocation3], 0
      %s22 = sshll.u32 %s0, 4
      %s23 = int_to_ptr.hbm [resolvable:$true] %s22
      %s24 = sshll.u32 [#allocation2], 4
      %s25 = int_to_ptr.vmem [resolvable:$true] %s24
      %27 = dma.hbm_to_vmem [thread:$0]  %s23, 896, %s25, [#allocation3]
    $region5: #{tpu_custom_call.1} parent=1 // pred_fallthru
      _
    // Predicated region
    $region6: #{tpu_custom_call.1} parent=1 // pred_check
      _
    $region7: #{tpu_custom_call.1} parent=1 // pred_check_branch
      %29 = sbr.rel (0) target = $region9
    $region8: #{tpu_custom_call.1} parent=1 // pred_region
      %31 = vsyncadd [#allocation6], 0
      %s32 = sshll.u32 %s1, 4
      %s33 = int_to_ptr.hbm [resolvable:$true] %s32
      %s34 = sshll.u32 [#allocation5], 4
      %s35 = int_to_ptr.vmem [resolvable:$true] %s34
      %40 = dma.hbm_to_vmem [thread:$0]  %s33, 50176, %s35, [#allocation6], 512, 512, 32
    $region9: #{tpu_custom_call.1} parent=1 // pred_fallthru
      _
    // Predicated region
    $region10: #{tpu_custom_call.1} parent=1 // pred_check
      _
    $region11: #{tpu_custom_call.1} parent=1 // pred_check_branch
      %42 = sbr.rel (0) target = $region13
    $region12: #{tpu_custom_call.1} parent=1 // pred_region
      %44 = vsyncadd [#allocation6], 0
      %s46 = sshll.u32 %s2, 4
      %s47 = int_to_ptr.hbm [resolvable:$true] %s46
      %s48 = sshll.u32 [#allocation7], 4
      %s49 = int_to_ptr.vmem [resolvable:$true] %s48
      %51 = dma.hbm_to_vmem [thread:$0]  %s47, 64, %s49, [#allocation6]
    $region13: #{tpu_custom_call.1} parent=1 // pred_fallthru
      _
    // Predicated region
    $region14: #{tpu_custom_call.1} parent=1 // pred_check
      _
    $region15: #{tpu_custom_call.1} parent=1 // pred_check_branch
      %53 = sbr.rel (0) target = $region17
    $region16: #{tpu_custom_call.1} parent=1 // pred_region
      %55 = vsyncadd [#allocation9], 0
      %s56 = sshll.u32 %s3, 4
      %s57 = int_to_ptr.hbm [resolvable:$true] %s56
      %s58 = sshll.u32 [#allocation8], 4
      %s59 = int_to_ptr.vmem [resolvable:$true] %s58
      %64 = dma.hbm_to_vmem [thread:$0]  %s57, 32768, %s59, [#allocation9], 512, 512, 32
    $region17: #{tpu_custom_call.1} parent=1 // pred_fallthru
      _
    // Predicated region
    $region18: #{tpu_custom_call.1} parent=1 // pred_check
      _
    $region19: #{tpu_custom_call.1} parent=1 // pred_check_branch
      %66 = sbr.rel (0) target = $region21
    $region20: #{tpu_custom_call.1} parent=1 // pred_region
      %68 = vsyncadd [#allocation9], 0
      %s70 = sshll.u32 %s4, 4
      %s71 = int_to_ptr.hbm [resolvable:$true] %s70
      %s72 = sshll.u32 [#allocation10], 4
      %s73 = int_to_ptr.vmem [resolvable:$true] %s72
      %75 = dma.hbm_to_vmem [thread:$0]  %s71, 64, %s73, [#allocation9]
    $region21: #{tpu_custom_call.1} parent=1 // pred_fallthru
      _
    // Predicated region
    $region22: #{tpu_custom_call.1} parent=1 // pred_check
      _
    $region23: #{tpu_custom_call.1} parent=1 // pred_check_branch
      %77 = sbr.rel (0) target = $region25
    $region24: #{tpu_custom_call.1} parent=1 // pred_region
      %79 = vsyncadd [#allocation12], 0
      %s80 = sshll.u32 %s5, 4
      %s81 = int_to_ptr.hbm [resolvable:$true] %s80
      %s82 = sshll.u32 [#allocation11], 4
      %s83 = int_to_ptr.vmem [resolvable:$true] %s82
      %88 = dma.hbm_to_vmem [thread:$0]  %s81, 8192, %s83, [#allocation12], 128, 128, 8
    $region25: #{tpu_custom_call.1} parent=1 // pred_fallthru
      _
    // Predicated region
    $region26: #{tpu_custom_call.1} parent=1 // pred_check
      _
    $region27: #{tpu_custom_call.1} parent=1 // pred_check_branch
      %90 = sbr.rel (0) target = $region29
    $region28: #{tpu_custom_call.1} parent=1 // pred_region
      %92 = vsyncadd [#allocation12], 0
      %s94 = sshll.u32 %s6, 4
      %s95 = int_to_ptr.hbm [resolvable:$true] %s94
      %s96 = sshll.u32 [#allocation13], 4
      %s97 = int_to_ptr.vmem [resolvable:$true] %s96
      %99 = dma.hbm_to_vmem [thread:$0]  %s95, 16, %s97, [#allocation12]
    $region29: #{tpu_custom_call.1} parent=1 // pred_fallthru
      _
    // Predicated region
    $region30: #{tpu_custom_call.1} parent=1 // pred_check
      _
    $region31: #{tpu_custom_call.1} parent=1 // pred_check_branch
      %101 = sbr.rel (0) target = $region33
    $region32: #{tpu_custom_call.1} parent=1 // pred_region
      %103 = dma.done [#allocation3], 896
    $region33: #{tpu_custom_call.1} parent=1 // pred_fallthru
      _
    // Predicated region
    $region34: #{tpu_custom_call.1} parent=1 // pred_check
      _
    $region35: #{tpu_custom_call.1} parent=1 // pred_check_branch
      %105 = sbr.rel (0) target = $region37
    $region36: #{tpu_custom_call.1} parent=1 // pred_region
      %107 = dma.done [#allocation6], 50176
    $region37: #{tpu_custom_call.1} parent=1 // pred_fallthru
      _
    // Predicated region
    $region38: #{tpu_custom_call.1} parent=1 // pred_check
      _
    $region39: #{tpu_custom_call.1} parent=1 // pred_check_branch
      %109 = sbr.rel (0) target = $region41
    $region40: #{tpu_custom_call.1} parent=1 // pred_region
      %111 = dma.done [#allocation6], 64
    $region41: #{tpu_custom_call.1} parent=1 // pred_fallthru
      _
    // Predicated region
    $region42: #{tpu_custom_call.1} parent=1 // pred_check
      _
    $region43: #{tpu_custom_call.1} parent=1 // pred_check_branch
      %113 = sbr.rel (0) target = $region45
    $region44: #{tpu_custom_call.1} parent=1 // pred_region
      %115 = dma.done [#allocation9], 32768
    $region45: #{tpu_custom_call.1} parent=1 // pred_fallthru
      _
    // Predicated region
    $region46: #{tpu_custom_call.1} parent=1 // pred_check
      _
    $region47: #{tpu_custom_call.1} parent=1 // pred_check_branch
      %117 = sbr.rel (0) target = $region49
    $region48: #{tpu_custom_call.1} parent=1 // pred_region
      %119 = dma.done [#allocation9], 64
    $region49: #{tpu_custom_call.1} parent=1 // pred_fallthru
      _
    // Predicated region
    $region50: #{tpu_custom_call.1} parent=1 // pred_check
      _
    $region51: #{tpu_custom_call.1} parent=1 // pred_check_branch
      %121 = sbr.rel (0) target = $region53
    $region52: #{tpu_custom_call.1} parent=1 // pred_region
      %123 = dma.done [#allocation12], 8192
    $region53: #{tpu_custom_call.1} parent=1 // pred_fallthru
      _
    // Predicated region
    $region54: #{tpu_custom_call.1} parent=1 // pred_check
      _
    $region55: #{tpu_custom_call.1} parent=1 // pred_check_branch
      %125 = sbr.rel (0) target = $region57
    $region56: #{tpu_custom_call.1} parent=1 // pred_region
      %127 = dma.done [#allocation12], 16
    $region57: #{tpu_custom_call.1} parent=1 // pred_fallthru
      _
    %v128 = vld [vmem:[#allocation2] sm:$0xff]
    %v129 = vld [vmem:[#allocation2 + $0x8] sm:$0xff]
    %v130 = vld [vmem:[#allocation2 + $0x10] sm:$0xff]
    %v131 = vld [vmem:[#allocation2 + $0x18] sm:$0xff]
    %v132 = vld [vmem:[#allocation2 + $0x20] sm:$0xff]
    %v133 = vld [vmem:[#allocation2 + $0x28] sm:$0xff]
    %v134 = vld [vmem:[#allocation2 + $0x30] sm:$0xff]
    %v135 = vld [vmem:[#allocation5] sm:$0xff]
    %v136 = vld [vmem:[#allocation5 + $0x8] sm:$0xff]
    %v137 = vld [vmem:[#allocation5 + $0x10] sm:$0xff]
    %v138 = vld [vmem:[#allocation5 + $0x18] sm:$0xff]
    %v139 = vld [vmem:[#allocation5 + $0x20] sm:$0xff]
    %v140 = vld [vmem:[#allocation5 + $0x28] sm:$0xff]
    %v141 = vld [vmem:[#allocation5 + $0x30] sm:$0xff]
    %v142 = vld [vmem:[#allocation5 + $0x38] sm:$0xff]
    %v143 = vld [vmem:[#allocation5 + $0x40] sm:$0xff]
    %v144 = vld [vmem:[#allocation5 + $0x48] sm:$0xff]
    %v145 = vld [vmem:[#allocation5 + $0x50] sm:$0xff]
    %v146 = vld [vmem:[#allocation5 + $0x58] sm:$0xff]
    %v147 = vld [vmem:[#allocation5 + $0x60] sm:$0xff]
    %v148 = vld [vmem:[#allocation5 + $0x68] sm:$0xff]
    %v149 = vld [vmem:[#allocation5 + $0x70] sm:$0xff]
    %v150 = vld [vmem:[#allocation5 + $0x78] sm:$0xff]
    %v151 = vld [vmem:[#allocation5 + $0x80] sm:$0xff]
    %v152 = vld [vmem:[#allocation5 + $0x88] sm:$0xff]
    %v153 = vld [vmem:[#allocation5 + $0x90] sm:$0xff]
    %v154 = vld [vmem:[#allocation5 + $0x98] sm:$0xff]
    %v155 = vld [vmem:[#allocation5 + $0xa0] sm:$0xff]
    %v156 = vld [vmem:[#allocation5 + $0xa8] sm:$0xff]
    %v157 = vld [vmem:[#allocation5 + $0xb0] sm:$0xff]
    %v158 = vld [vmem:[#allocation5 + $0xb8] sm:$0xff]
    %v159 = vld [vmem:[#allocation5 + $0xc0] sm:$0xff]
    %v160 = vld [vmem:[#allocation5 + $0xc8] sm:$0xff]
    %v161 = vld [vmem:[#allocation5 + $0xd0] sm:$0xff]
    %v162 = vld [vmem:[#allocation5 + $0xd8] sm:$0xff]
    %v163 = vld [vmem:[#allocation5 + $0xe0] sm:$0xff]
    %v164 = vld [vmem:[#allocation5 + $0xe8] sm:$0xff]
    %v165 = vld [vmem:[#allocation5 + $0xf0] sm:$0xff]
    %v166 = vld [vmem:[#allocation5 + $0xf8] sm:$0xff]
    %v167 = vld [vmem:[#allocation5 + $0x100] sm:$0xff]
    %v168 = vld [vmem:[#allocation5 + $0x108] sm:$0xff]
    %v169 = vld [vmem:[#allocation5 + $0x110] sm:$0xff]
    %v170 = vld [vmem:[#allocation5 + $0x118] sm:$0xff]
    %v171 = vld [vmem:[#allocation5 + $0x120] sm:$0xff]
    %v172 = vld [vmem:[#allocation5 + $0x128] sm:$0xff]
    %v173 = vld [vmem:[#allocation5 + $0x130] sm:$0xff]
    %v174 = vld [vmem:[#allocation5 + $0x138] sm:$0xff]
    %v175 = vld [vmem:[#allocation5 + $0x140] sm:$0xff]
    %v176 = vld [vmem:[#allocation5 + $0x148] sm:$0xff]
    %v177 = vld [vmem:[#allocation5 + $0x150] sm:$0xff]
    %v178 = vld [vmem:[#allocation5 + $0x158] sm:$0xff]
    %v179 = vld [vmem:[#allocation5 + $0x160] sm:$0xff]
    %v180 = vld [vmem:[#allocation5 + $0x168] sm:$0xff]
    %v181 = vld [vmem:[#allocation5 + $0x170] sm:$0xff]
    %v182 = vld [vmem:[#allocation5 + $0x178] sm:$0xff]
    %v183 = vld [vmem:[#allocation5 + $0x180] sm:$0xff]
    %v184 = vld [vmem:[#allocation5 + $0x188] sm:$0xff]
    %v185 = vld [vmem:[#allocation5 + $0x190] sm:$0xff]
    %v186 = vld [vmem:[#allocation5 + $0x198] sm:$0xff]
    %v187 = vld [vmem:[#allocation5 + $0x1a0] sm:$0xff]
    %v188 = vld [vmem:[#allocation5 + $0x1a8] sm:$0xff]
    %v189 = vld [vmem:[#allocation5 + $0x1b0] sm:$0xff]
    %v190 = vld [vmem:[#allocation5 + $0x1b8] sm:$0xff]
    %v191 = vld [vmem:[#allocation5 + $0x1c0] sm:$0xff]
    %v192 = vld [vmem:[#allocation5 + $0x1c8] sm:$0xff]
    %v193 = vld [vmem:[#allocation5 + $0x1d0] sm:$0xff]
    %v194 = vld [vmem:[#allocation5 + $0x1d8] sm:$0xff]
    %v195 = vld [vmem:[#allocation5 + $0x1e0] sm:$0xff]
    %v196 = vld [vmem:[#allocation5 + $0x1e8] sm:$0xff]
    %v197 = vld [vmem:[#allocation5 + $0x1f0] sm:$0xff]
    %v198 = vld [vmem:[#allocation5 + $0x1f8] sm:$0xff]
    %v199 = vld [vmem:[#allocation5 + $0x200] sm:$0xff]
    %v200 = vld [vmem:[#allocation5 + $0x208] sm:$0xff]
    %v201 = vld [vmem:[#allocation5 + $0x210] sm:$0xff]
    %v202 = vld [vmem:[#allocation5 + $0x218] sm:$0xff]
    %v203 = vld [vmem:[#allocation5 + $0x220] sm:$0xff]
    %v204 = vld [vmem:[#allocation5 + $0x228] sm:$0xff]
    %v205 = vld [vmem:[#allocation5 + $0x230] sm:$0xff]
    %v206 = vld [vmem:[#allocation5 + $0x238] sm:$0xff]
    %v207 = vld [vmem:[#allocation5 + $0x240] sm:$0xff]
    %v208 = vld [vmem:[#allocation5 + $0x248] sm:$0xff]
    %v209 = vld [vmem:[#allocation5 + $0x250] sm:$0xff]
    %v210 = vld [vmem:[#allocation5 + $0x258] sm:$0xff]
    %v211 = vld [vmem:[#allocation5 + $0x260] sm:$0xff]
    %v212 = vld [vmem:[#allocation5 + $0x268] sm:$0xff]
    %v213 = vld [vmem:[#allocation5 + $0x270] sm:$0xff]
    %v214 = vld [vmem:[#allocation5 + $0x278] sm:$0xff]
    %v215 = vld [vmem:[#allocation5 + $0x280] sm:$0xff]
    %v216 = vld [vmem:[#allocation5 + $0x288] sm:$0xff]
    %v217 = vld [vmem:[#allocation5 + $0x290] sm:$0xff]
    %v218 = vld [vmem:[#allocation5 + $0x298] sm:$0xff]
    %v219 = vld [vmem:[#allocation5 + $0x2a0] sm:$0xff]
    %v220 = vld [vmem:[#allocation5 + $0x2a8] sm:$0xff]
    %v221 = vld [vmem:[#allocation5 + $0x2b0] sm:$0xff]
    %v222 = vld [vmem:[#allocation5 + $0x2b8] sm:$0xff]
    %v223 = vld [vmem:[#allocation5 + $0x2c0] sm:$0xff]
    %v224 = vld [vmem:[#allocation5 + $0x2c8] sm:$0xff]
    %v225 = vld [vmem:[#allocation5 + $0x2d0] sm:$0xff]
    %v226 = vld [vmem:[#allocation5 + $0x2d8] sm:$0xff]
    %v227 = vld [vmem:[#allocation5 + $0x2e0] sm:$0xff]
    %v228 = vld [vmem:[#allocation5 + $0x2e8] sm:$0xff]
    %v229 = vld [vmem:[#allocation5 + $0x2f0] sm:$0xff]
    %v230 = vld [vmem:[#allocation5 + $0x2f8] sm:$0xff]
    %v231 = vld [vmem:[#allocation5 + $0x300] sm:$0xff]
    %v232 = vld [vmem:[#allocation5 + $0x308] sm:$0xff]
    %v233 = vld [vmem:[#allocation5 + $0x310] sm:$0xff]
    %v234 = vld [vmem:[#allocation5 + $0x318] sm:$0xff]
    %v235 = vld [vmem:[#allocation5 + $0x320] sm:$0xff]
    %v236 = vld [vmem:[#allocation5 + $0x328] sm:$0xff]
    %v237 = vld [vmem:[#allocation5 + $0x330] sm:$0xff]
    %v238 = vld [vmem:[#allocation5 + $0x338] sm:$0xff]
    %v239 = vld [vmem:[#allocation5 + $0x340] sm:$0xff]
    %v240 = vld [vmem:[#allocation5 + $0x348] sm:$0xff]
    %v241 = vld [vmem:[#allocation5 + $0x350] sm:$0xff]
    %v242 = vld [vmem:[#allocation5 + $0x358] sm:$0xff]
    %v243 = vld [vmem:[#allocation5 + $0x360] sm:$0xff]
    %v244 = vld [vmem:[#allocation5 + $0x368] sm:$0xff]
    %v245 = vld [vmem:[#allocation5 + $0x370] sm:$0xff]
    %v246 = vld [vmem:[#allocation5 + $0x378] sm:$0xff]
    %v247 = vld [vmem:[#allocation5 + $0x380] sm:$0xff]
    %v248 = vld [vmem:[#allocation5 + $0x388] sm:$0xff]
    %v249 = vld [vmem:[#allocation5 + $0x390] sm:$0xff]
    %v250 = vld [vmem:[#allocation5 + $0x398] sm:$0xff]
    %v251 = vld [vmem:[#allocation5 + $0x3a0] sm:$0xff]
    %v252 = vld [vmem:[#allocation5 + $0x3a8] sm:$0xff]
    %v253 = vld [vmem:[#allocation5 + $0x3b0] sm:$0xff]
    %v254 = vld [vmem:[#allocation5 + $0x3b8] sm:$0xff]
    %v255 = vld [vmem:[#allocation5 + $0x3c0] sm:$0xff]
    %v256 = vld [vmem:[#allocation5 + $0x3c8] sm:$0xff]
    %v257 = vld [vmem:[#allocation5 + $0x3d0] sm:$0xff]
    %v258 = vld [vmem:[#allocation5 + $0x3d8] sm:$0xff]
    %v259 = vld [vmem:[#allocation5 + $0x3e0] sm:$0xff]
    %v260 = vld [vmem:[#allocation5 + $0x3e8] sm:$0xff]
    %v261 = vld [vmem:[#allocation5 + $0x3f0] sm:$0xff]
    %v262 = vld [vmem:[#allocation5 + $0x3f8] sm:$0xff]
    %v263 = vld [vmem:[#allocation5 + $0x400] sm:$0xff]
    %v264 = vld [vmem:[#allocation5 + $0x408] sm:$0xff]
    %v265 = vld [vmem:[#allocation5 + $0x410] sm:$0xff]
    %v266 = vld [vmem:[#allocation5 + $0x418] sm:$0xff]
    %v267 = vld [vmem:[#allocation5 + $0x420] sm:$0xff]
    %v268 = vld [vmem:[#allocation5 + $0x428] sm:$0xff]
    %v269 = vld [vmem:[#allocation5 + $0x430] sm:$0xff]
    %v270 = vld [vmem:[#allocation5 + $0x438] sm:$0xff]
    %v271 = vld [vmem:[#allocation5 + $0x440] sm:$0xff]
    %v272 = vld [vmem:[#allocation5 + $0x448] sm:$0xff]
    %v273 = vld [vmem:[#allocation5 + $0x450] sm:$0xff]
    %v274 = vld [vmem:[#allocation5 + $0x458] sm:$0xff]
    %v275 = vld [vmem:[#allocation5 + $0x460] sm:$0xff]
    %v276 = vld [vmem:[#allocation5 + $0x468] sm:$0xff]
    %v277 = vld [vmem:[#allocation5 + $0x470] sm:$0xff]
    %v278 = vld [vmem:[#allocation5 + $0x478] sm:$0xff]
    %v279 = vld [vmem:[#allocation5 + $0x480] sm:$0xff]
    %v280 = vld [vmem:[#allocation5 + $0x488] sm:$0xff]
    %v281 = vld [vmem:[#allocation5 + $0x490] sm:$0xff]
    %v282 = vld [vmem:[#allocation5 + $0x498] sm:$0xff]
    %v283 = vld [vmem:[#allocation5 + $0x4a0] sm:$0xff]
    %v284 = vld [vmem:[#allocation5 + $0x4a8] sm:$0xff]
    %v285 = vld [vmem:[#allocation5 + $0x4b0] sm:$0xff]
    %v286 = vld [vmem:[#allocation5 + $0x4b8] sm:$0xff]
    %v287 = vld [vmem:[#allocation5 + $0x4c0] sm:$0xff]
    %v288 = vld [vmem:[#allocation5 + $0x4c8] sm:$0xff]
    %v289 = vld [vmem:[#allocation5 + $0x4d0] sm:$0xff]
    %v290 = vld [vmem:[#allocation5 + $0x4d8] sm:$0xff]
    %v291 = vld [vmem:[#allocation5 + $0x4e0] sm:$0xff]
    %v292 = vld [vmem:[#allocation5 + $0x4e8] sm:$0xff]
    %v293 = vld [vmem:[#allocation5 + $0x4f0] sm:$0xff]
    %v294 = vld [vmem:[#allocation5 + $0x4f8] sm:$0xff]
    %v295 = vld [vmem:[#allocation5 + $0x500] sm:$0xff]
    %v296 = vld [vmem:[#allocation5 + $0x508] sm:$0xff]
    %v297 = vld [vmem:[#allocation5 + $0x510] sm:$0xff]
    %v298 = vld [vmem:[#allocation5 + $0x518] sm:$0xff]
    %v299 = vld [vmem:[#allocation5 + $0x520] sm:$0xff]
    %v300 = vld [vmem:[#allocation5 + $0x528] sm:$0xff]
    %v301 = vld [vmem:[#allocation5 + $0x530] sm:$0xff]
    %v302 = vld [vmem:[#allocation5 + $0x538] sm:$0xff]
    %v303 = vld [vmem:[#allocation5 + $0x540] sm:$0xff]
    %v304 = vld [vmem:[#allocation5 + $0x548] sm:$0xff]
    %v305 = vld [vmem:[#allocation5 + $0x550] sm:$0xff]
    %v306 = vld [vmem:[#allocation5 + $0x558] sm:$0xff]
    %v307 = vld [vmem:[#allocation5 + $0x560] sm:$0xff]
    %v308 = vld [vmem:[#allocation5 + $0x568] sm:$0xff]
    %v309 = vld [vmem:[#allocation5 + $0x570] sm:$0xff]
    %v310 = vld [vmem:[#allocation5 + $0x578] sm:$0xff]
    %v311 = vld [vmem:[#allocation5 + $0x580] sm:$0xff]
    %v312 = vld [vmem:[#allocation5 + $0x588] sm:$0xff]
    %v313 = vld [vmem:[#allocation5 + $0x590] sm:$0xff]
    %v314 = vld [vmem:[#allocation5 + $0x598] sm:$0xff]
    %v315 = vld [vmem:[#allocation5 + $0x5a0] sm:$0xff]
    %v316 = vld [vmem:[#allocation5 + $0x5a8] sm:$0xff]
    %v317 = vld [vmem:[#allocation5 + $0x5b0] sm:$0xff]
    %v318 = vld [vmem:[#allocation5 + $0x5b8] sm:$0xff]
    %v319 = vld [vmem:[#allocation5 + $0x5c0] sm:$0xff]
    %v320 = vld [vmem:[#allocation5 + $0x5c8] sm:$0xff]
    %v321 = vld [vmem:[#allocation5 + $0x5d0] sm:$0xff]
    %v322 = vld [vmem:[#allocation5 + $0x5d8] sm:$0xff]
    %v323 = vld [vmem:[#allocation5 + $0x5e0] sm:$0xff]
    %v324 = vld [vmem:[#allocation5 + $0x5e8] sm:$0xff]
    %v325 = vld [vmem:[#allocation5 + $0x5f0] sm:$0xff]
    %v326 = vld [vmem:[#allocation5 + $0x5f8] sm:$0xff]
    %v327 = vld [vmem:[#allocation5 + $0x600] sm:$0xff]
    %v328 = vld [vmem:[#allocation5 + $0x608] sm:$0xff]
    %v329 = vld [vmem:[#allocation5 + $0x610] sm:$0xff]
    %v330 = vld [vmem:[#allocation5 + $0x618] sm:$0xff]
    %v331 = vld [vmem:[#allocation5 + $0x620] sm:$0xff]
    %v332 = vld [vmem:[#allocation5 + $0x628] sm:$0xff]
    %v333 = vld [vmem:[#allocation5 + $0x630] sm:$0xff]
    %v334 = vld [vmem:[#allocation5 + $0x638] sm:$0xff]
    %v335 = vld [vmem:[#allocation5 + $0x640] sm:$0xff]
    %v336 = vld [vmem:[#allocation5 + $0x648] sm:$0xff]
    %v337 = vld [vmem:[#allocation5 + $0x650] sm:$0xff]
    %v338 = vld [vmem:[#allocation5 + $0x658] sm:$0xff]
    %v339 = vld [vmem:[#allocation5 + $0x660] sm:$0xff]
    %v340 = vld [vmem:[#allocation5 + $0x668] sm:$0xff]
    %v341 = vld [vmem:[#allocation5 + $0x670] sm:$0xff]
    %v342 = vld [vmem:[#allocation5 + $0x678] sm:$0xff]
    %v343 = vld [vmem:[#allocation5 + $0x680] sm:$0xff]
    %v344 = vld [vmem:[#allocation5 + $0x688] sm:$0xff]
    %v345 = vld [vmem:[#allocation5 + $0x690] sm:$0xff]
    %v346 = vld [vmem:[#allocation5 + $0x698] sm:$0xff]
    %v347 = vld [vmem:[#allocation5 + $0x6a0] sm:$0xff]
    %v348 = vld [vmem:[#allocation5 + $0x6a8] sm:$0xff]
    %v349 = vld [vmem:[#allocation5 + $0x6b0] sm:$0xff]
    %v350 = vld [vmem:[#allocation5 + $0x6b8] sm:$0xff]
    %v351 = vld [vmem:[#allocation5 + $0x6c0] sm:$0xff]
    %v352 = vld [vmem:[#allocation5 + $0x6c8] sm:$0xff]
    %v353 = vld [vmem:[#allocation5 + $0x6d0] sm:$0xff]
    %v354 = vld [vmem:[#allocation5 + $0x6d8] sm:$0xff]
    %v355 = vld [vmem:[#allocation5 + $0x6e0] sm:$0xff]
    %v356 = vld [vmem:[#allocation5 + $0x6e8] sm:$0xff]
    %v357 = vld [vmem:[#allocation5 + $0x6f0] sm:$0xff]
    %v358 = vld [vmem:[#allocation5 + $0x6f8] sm:$0xff]
    %v359 = vld [vmem:[#allocation5 + $0x700] sm:$0xff]
    %v360 = vld [vmem:[#allocation5 + $0x708] sm:$0xff]
    %v361 = vld [vmem:[#allocation5 + $0x710] sm:$0xff]
    %v362 = vld [vmem:[#allocation5 + $0x718] sm:$0xff]
    %v363 = vld [vmem:[#allocation5 + $0x720] sm:$0xff]
    %v364 = vld [vmem:[#allocation5 + $0x728] sm:$0xff]
    %v365 = vld [vmem:[#allocation5 + $0x730] sm:$0xff]
    %v366 = vld [vmem:[#allocation5 + $0x738] sm:$0xff]
    %v367 = vld [vmem:[#allocation5 + $0x740] sm:$0xff]
    %v368 = vld [vmem:[#allocation5 + $0x748] sm:$0xff]
    %v369 = vld [vmem:[#allocation5 + $0x750] sm:$0xff]
    %v370 = vld [vmem:[#allocation5 + $0x758] sm:$0xff]
    %v371 = vld [vmem:[#allocation5 + $0x760] sm:$0xff]
    %v372 = vld [vmem:[#allocation5 + $0x768] sm:$0xff]
    %v373 = vld [vmem:[#allocation5 + $0x770] sm:$0xff]
    %v374 = vld [vmem:[#allocation5 + $0x778] sm:$0xff]
    %v375 = vld [vmem:[#allocation5 + $0x780] sm:$0xff]
    %v376 = vld [vmem:[#allocation5 + $0x788] sm:$0xff]
    %v377 = vld [vmem:[#allocation5 + $0x790] sm:$0xff]
    %v378 = vld [vmem:[#allocation5 + $0x798] sm:$0xff]
    %v379 = vld [vmem:[#allocation5 + $0x7a0] sm:$0xff]
    %v380 = vld [vmem:[#allocation5 + $0x7a8] sm:$0xff]
    %v381 = vld [vmem:[#allocation5 + $0x7b0] sm:$0xff]
    %v382 = vld [vmem:[#allocation5 + $0x7b8] sm:$0xff]
    %v383 = vld [vmem:[#allocation5 + $0x7c0] sm:$0xff]
    %v384 = vld [vmem:[#allocation5 + $0x7c8] sm:$0xff]
    %v385 = vld [vmem:[#allocation5 + $0x7d0] sm:$0xff]
    %v386 = vld [vmem:[#allocation5 + $0x7d8] sm:$0xff]
    %v387 = vld [vmem:[#allocation5 + $0x7e0] sm:$0xff]
    %v388 = vld [vmem:[#allocation5 + $0x7e8] sm:$0xff]
    %v389 = vld [vmem:[#allocation5 + $0x7f0] sm:$0xff]
    %v390 = vld [vmem:[#allocation5 + $0x7f8] sm:$0xff]
    %v391 = vld [vmem:[#allocation5 + $0x800] sm:$0xff]
    %v392 = vld [vmem:[#allocation5 + $0x808] sm:$0xff]
    %v393 = vld [vmem:[#allocation5 + $0x810] sm:$0xff]
    %v394 = vld [vmem:[#allocation5 + $0x818] sm:$0xff]
    %v395 = vld [vmem:[#allocation5 + $0x820] sm:$0xff]
    %v396 = vld [vmem:[#allocation5 + $0x828] sm:$0xff]
    %v397 = vld [vmem:[#allocation5 + $0x830] sm:$0xff]
    %v398 = vld [vmem:[#allocation5 + $0x838] sm:$0xff]
    %v399 = vld [vmem:[#allocation5 + $0x840] sm:$0xff]
    %v400 = vld [vmem:[#allocation5 + $0x848] sm:$0xff]
    %v401 = vld [vmem:[#allocation5 + $0x850] sm:$0xff]
    %v402 = vld [vmem:[#allocation5 + $0x858] sm:$0xff]
    %v403 = vld [vmem:[#allocation5 + $0x860] sm:$0xff]
    %v404 = vld [vmem:[#allocation5 + $0x868] sm:$0xff]
    %v405 = vld [vmem:[#allocation5 + $0x870] sm:$0xff]
    %v406 = vld [vmem:[#allocation5 + $0x878] sm:$0xff]
    %v407 = vld [vmem:[#allocation5 + $0x880] sm:$0xff]
    %v408 = vld [vmem:[#allocation5 + $0x888] sm:$0xff]
    %v409 = vld [vmem:[#allocation5 + $0x890] sm:$0xff]
    %v410 = vld [vmem:[#allocation5 + $0x898] sm:$0xff]
    %v411 = vld [vmem:[#allocation5 + $0x8a0] sm:$0xff]
    %v412 = vld [vmem:[#allocation5 + $0x8a8] sm:$0xff]
    %v413 = vld [vmem:[#allocation5 + $0x8b0] sm:$0xff]
    %v414 = vld [vmem:[#allocation5 + $0x8b8] sm:$0xff]
    %v415 = vld [vmem:[#allocation5 + $0x8c0] sm:$0xff]
    %v416 = vld [vmem:[#allocation5 + $0x8c8] sm:$0xff]
    %v417 = vld [vmem:[#allocation5 + $0x8d0] sm:$0xff]
    %v418 = vld [vmem:[#allocation5 + $0x8d8] sm:$0xff]
    %v419 = vld [vmem:[#allocation5 + $0x8e0] sm:$0xff]
    %v420 = vld [vmem:[#allocation5 + $0x8e8] sm:$0xff]
    %v421 = vld [vmem:[#allocation5 + $0x8f0] sm:$0xff]
    %v422 = vld [vmem:[#allocation5 + $0x8f8] sm:$0xff]
    %v423 = vld [vmem:[#allocation5 + $0x900] sm:$0xff]
    %v424 = vld [vmem:[#allocation5 + $0x908] sm:$0xff]
    %v425 = vld [vmem:[#allocation5 + $0x910] sm:$0xff]
    %v426 = vld [vmem:[#allocation5 + $0x918] sm:$0xff]
    %v427 = vld [vmem:[#allocation5 + $0x920] sm:$0xff]
    %v428 = vld [vmem:[#allocation5 + $0x928] sm:$0xff]
    %v429 = vld [vmem:[#allocation5 + $0x930] sm:$0xff]
    %v430 = vld [vmem:[#allocation5 + $0x938] sm:$0xff]
    %v431 = vld [vmem:[#allocation5 + $0x940] sm:$0xff]
    %v432 = vld [vmem:[#allocation5 + $0x948] sm:$0xff]
    %v433 = vld [vmem:[#allocation5 + $0x950] sm:$0xff]
    %v434 = vld [vmem:[#allocation5 + $0x958] sm:$0xff]
    %v435 = vld [vmem:[#allocation5 + $0x960] sm:$0xff]
    %v436 = vld [vmem:[#allocation5 + $0x968] sm:$0xff]
    %v437 = vld [vmem:[#allocation5 + $0x970] sm:$0xff]
    %v438 = vld [vmem:[#allocation5 + $0x978] sm:$0xff]
    %v439 = vld [vmem:[#allocation5 + $0x980] sm:$0xff]
    %v440 = vld [vmem:[#allocation5 + $0x988] sm:$0xff]
    %v441 = vld [vmem:[#allocation5 + $0x990] sm:$0xff]
    %v442 = vld [vmem:[#allocation5 + $0x998] sm:$0xff]
    %v443 = vld [vmem:[#allocation5 + $0x9a0] sm:$0xff]
    %v444 = vld [vmem:[#allocation5 + $0x9a8] sm:$0xff]
    %v445 = vld [vmem:[#allocation5 + $0x9b0] sm:$0xff]
    %v446 = vld [vmem:[#allocation5 + $0x9b8] sm:$0xff]
    %v447 = vld [vmem:[#allocation5 + $0x9c0] sm:$0xff]
    %v448 = vld [vmem:[#allocation5 + $0x9c8] sm:$0xff]
    %v449 = vld [vmem:[#allocation5 + $0x9d0] sm:$0xff]
    %v450 = vld [vmem:[#allocation5 + $0x9d8] sm:$0xff]
    %v451 = vld [vmem:[#allocation5 + $0x9e0] sm:$0xff]
    %v452 = vld [vmem:[#allocation5 + $0x9e8] sm:$0xff]
    %v453 = vld [vmem:[#allocation5 + $0x9f0] sm:$0xff]
    %v454 = vld [vmem:[#allocation5 + $0x9f8] sm:$0xff]
    %v455 = vld [vmem:[#allocation5 + $0xa00] sm:$0xff]
    %v456 = vld [vmem:[#allocation5 + $0xa08] sm:$0xff]
    %v457 = vld [vmem:[#allocation5 + $0xa10] sm:$0xff]
    %v458 = vld [vmem:[#allocation5 + $0xa18] sm:$0xff]
    %v459 = vld [vmem:[#allocation5 + $0xa20] sm:$0xff]
    %v460 = vld [vmem:[#allocation5 + $0xa28] sm:$0xff]
    %v461 = vld [vmem:[#allocation5 + $0xa30] sm:$0xff]
    %v462 = vld [vmem:[#allocation5 + $0xa38] sm:$0xff]
    %v463 = vld [vmem:[#allocation5 + $0xa40] sm:$0xff]
    %v464 = vld [vmem:[#allocation5 + $0xa48] sm:$0xff]
    %v465 = vld [vmem:[#allocation5 + $0xa50] sm:$0xff]
    %v466 = vld [vmem:[#allocation5 + $0xa58] sm:$0xff]
    %v467 = vld [vmem:[#allocation5 + $0xa60] sm:$0xff]
    %v468 = vld [vmem:[#allocation5 + $0xa68] sm:$0xff]
    %v469 = vld [vmem:[#allocation5 + $0xa70] sm:$0xff]
    %v470 = vld [vmem:[#allocation5 + $0xa78] sm:$0xff]
    %v471 = vld [vmem:[#allocation5 + $0xa80] sm:$0xff]
    %v472 = vld [vmem:[#allocation5 + $0xa88] sm:$0xff]
    %v473 = vld [vmem:[#allocation5 + $0xa90] sm:$0xff]
    %v474 = vld [vmem:[#allocation5 + $0xa98] sm:$0xff]
    %v475 = vld [vmem:[#allocation5 + $0xaa0] sm:$0xff]
    %v476 = vld [vmem:[#allocation5 + $0xaa8] sm:$0xff]
    %v477 = vld [vmem:[#allocation5 + $0xab0] sm:$0xff]
    %v478 = vld [vmem:[#allocation5 + $0xab8] sm:$0xff]
    %v479 = vld [vmem:[#allocation5 + $0xac0] sm:$0xff]
    %v480 = vld [vmem:[#allocation5 + $0xac8] sm:$0xff]
    %v481 = vld [vmem:[#allocation5 + $0xad0] sm:$0xff]
    %v482 = vld [vmem:[#allocation5 + $0xad8] sm:$0xff]
    %v483 = vld [vmem:[#allocation5 + $0xae0] sm:$0xff]
    %v484 = vld [vmem:[#allocation5 + $0xae8] sm:$0xff]
    %v485 = vld [vmem:[#allocation5 + $0xaf0] sm:$0xff]
    %v486 = vld [vmem:[#allocation5 + $0xaf8] sm:$0xff]
    %v487 = vld [vmem:[#allocation5 + $0xb00] sm:$0xff]
    %v488 = vld [vmem:[#allocation5 + $0xb08] sm:$0xff]
    %v489 = vld [vmem:[#allocation5 + $0xb10] sm:$0xff]
    %v490 = vld [vmem:[#allocation5 + $0xb18] sm:$0xff]
    %v491 = vld [vmem:[#allocation5 + $0xb20] sm:$0xff]
    %v492 = vld [vmem:[#allocation5 + $0xb28] sm:$0xff]
    %v493 = vld [vmem:[#allocation5 + $0xb30] sm:$0xff]
    %v494 = vld [vmem:[#allocation5 + $0xb38] sm:$0xff]
    %v495 = vld [vmem:[#allocation5 + $0xb40] sm:$0xff]
    %v496 = vld [vmem:[#allocation5 + $0xb48] sm:$0xff]
    %v497 = vld [vmem:[#allocation5 + $0xb50] sm:$0xff]
    %v498 = vld [vmem:[#allocation5 + $0xb58] sm:$0xff]
    %v499 = vld [vmem:[#allocation5 + $0xb60] sm:$0xff]
    %v500 = vld [vmem:[#allocation5 + $0xb68] sm:$0xff]
    %v501 = vld [vmem:[#allocation5 + $0xb70] sm:$0xff]
    %v502 = vld [vmem:[#allocation5 + $0xb78] sm:$0xff]
    %v503 = vld [vmem:[#allocation5 + $0xb80] sm:$0xff]
    %v504 = vld [vmem:[#allocation5 + $0xb88] sm:$0xff]
    %v505 = vld [vmem:[#allocation5 + $0xb90] sm:$0xff]
    %v506 = vld [vmem:[#allocation5 + $0xb98] sm:$0xff]
    %v507 = vld [vmem:[#allocation5 + $0xba0] sm:$0xff]
    %v508 = vld [vmem:[#allocation5 + $0xba8] sm:$0xff]
    %v509 = vld [vmem:[#allocation5 + $0xbb0] sm:$0xff]
    %v510 = vld [vmem:[#allocation5 + $0xbb8] sm:$0xff]
    %v511 = vld [vmem:[#allocation5 + $0xbc0] sm:$0xff]
    %v512 = vld [vmem:[#allocation5 + $0xbc8] sm:$0xff]
    %v513 = vld [vmem:[#allocation5 + $0xbd0] sm:$0xff]
    %v514 = vld [vmem:[#allocation5 + $0xbd8] sm:$0xff]
    %v515 = vld [vmem:[#allocation5 + $0xbe0] sm:$0xff]
    %v516 = vld [vmem:[#allocation5 + $0xbe8] sm:$0xff]
    %v517 = vld [vmem:[#allocation5 + $0xbf0] sm:$0xff]
    %v518 = vld [vmem:[#allocation5 + $0xbf8] sm:$0xff]
    %v519 = vld [vmem:[#allocation5 + $0xc00] sm:$0xff]
    %v520 = vld [vmem:[#allocation5 + $0xc08] sm:$0xff]
    %v521 = vld [vmem:[#allocation5 + $0xc10] sm:$0xff]
    %v522 = vld [vmem:[#allocation5 + $0xc18] sm:$0xff]
    %v523 = vld [vmem:[#allocation5 + $0xc20] sm:$0xff]
    %v524 = vld [vmem:[#allocation5 + $0xc28] sm:$0xff]
    %v525 = vld [vmem:[#allocation5 + $0xc30] sm:$0xff]
    %v526 = vld [vmem:[#allocation5 + $0xc38] sm:$0xff]
    %v527 = vld [vmem:[#allocation7] sm:$0xf]
    %v529 = vperm.slane %v527, 0
    %v530 = vperm.slane %v527, 1
    %v531 = vperm.slane %v527, 2
    %v532 = vperm.slane %v527, 3
    %vm537 = vcmask 130048
    %v539 = vsel %vm537, %v134, 0
    %541 = vmatpush.msra.mxu0 %v195
    %542 = vmatpush.msra.mxu0 %v191
    %543 = vmatpush.msra.mxu0 %v187
    %544 = vmatpush.msra.mxu0 %v183
    %545 = vmatpush.msra.mxu0 %v179
    %546 = vmatpush.msra.mxu0 %v175
    %547 = vmatpush.msra.mxu0 %v171
    %548 = vmatpush.msra.mxu0 %v167
    %549 = vmatpush.msra.mxu0 %v163
    %550 = vmatpush.msra.mxu0 %v159
    %551 = vmatpush.msra.mxu0 %v155
    %552 = vmatpush.msra.mxu0 %v151
    %553 = vmatpush.msra.mxu0 %v147
    %554 = vmatpush.msra.mxu0 %v143
    %555 = vmatpush.msra.mxu0 %v139
    %556 = vmatpush.msra.mxu0 %v135
    %557 = vmatmul.f32.gmra.mxu0 %v128
    %v558 = vpop.f32.mrf.mxu0
    %v559 = vadd.f32 %v529, %v558
    %560 = vdwg.mxu0
    %561 = vmatpush.msra.mxu0 %v259
    %562 = vmatpush.msra.mxu0 %v255
    %563 = vmatpush.msra.mxu0 %v251
    %564 = vmatpush.msra.mxu0 %v247
    %565 = vmatpush.msra.mxu0 %v243
    %566 = vmatpush.msra.mxu0 %v239
    %567 = vmatpush.msra.mxu0 %v235
    %568 = vmatpush.msra.mxu0 %v231
    %569 = vmatpush.msra.mxu0 %v227
    %570 = vmatpush.msra.mxu0 %v223
    %571 = vmatpush.msra.mxu0 %v219
    %572 = vmatpush.msra.mxu0 %v215
    %573 = vmatpush.msra.mxu0 %v211
    %574 = vmatpush.msra.mxu0 %v207
    %575 = vmatpush.msra.mxu0 %v203
    %576 = vmatpush.msra.mxu0 %v199
    %577 = vmatmul.f32.gmra.mxu0 %v129
    %v578 = vpop.f32.mrf.mxu0
    %v579 = vadd.f32 %v559, %v578
    %580 = vdwg.mxu0
    %581 = vmatpush.msra.mxu0 %v323
    %582 = vmatpush.msra.mxu0 %v319
    %583 = vmatpush.msra.mxu0 %v315
    %584 = vmatpush.msra.mxu0 %v311
    %585 = vmatpush.msra.mxu0 %v307
    %586 = vmatpush.msra.mxu0 %v303
    %587 = vmatpush.msra.mxu0 %v299
    %588 = vmatpush.msra.mxu0 %v295
    %589 = vmatpush.msra.mxu0 %v291
    %590 = vmatpush.msra.mxu0 %v287
    %591 = vmatpush.msra.mxu0 %v283
    %592 = vmatpush.msra.mxu0 %v279
    %593 = vmatpush.msra.mxu0 %v275
    %594 = vmatpush.msra.mxu0 %v271
    %595 = vmatpush.msra.mxu0 %v267
    %596 = vmatpush.msra.mxu0 %v263
    %597 = vmatmul.f32.gmra.mxu0 %v130
    %v598 = vpop.f32.mrf.mxu0
    %v599 = vadd.f32 %v579, %v598
    %600 = vdwg.mxu0
    %601 = vmatpush.msra.mxu0 %v387
    %602 = vmatpush.msra.mxu0 %v383
    %603 = vmatpush.msra.mxu0 %v379
    %604 = vmatpush.msra.mxu0 %v375
    %605 = vmatpush.msra.mxu0 %v371
    %606 = vmatpush.msra.mxu0 %v367
    %607 = vmatpush.msra.mxu0 %v363
    %608 = vmatpush.msra.mxu0 %v359
    %609 = vmatpush.msra.mxu0 %v355
    %610 = vmatpush.msra.mxu0 %v351
    %611 = vmatpush.msra.mxu0 %v347
    %612 = vmatpush.msra.mxu0 %v343
    %613 = vmatpush.msra.mxu0 %v339
    %614 = vmatpush.msra.mxu0 %v335
    %615 = vmatpush.msra.mxu0 %v331
    %616 = vmatpush.msra.mxu0 %v327
    %617 = vmatmul.f32.gmra.mxu0 %v131
    %v618 = vpop.f32.mrf.mxu0
    %v619 = vadd.f32 %v599, %v618
    %620 = vdwg.mxu0
    %621 = vmatpush.msra.mxu0 %v451
    %622 = vmatpush.msra.mxu0 %v447
    %623 = vmatpush.msra.mxu0 %v443
    %624 = vmatpush.msra.mxu0 %v439
    %625 = vmatpush.msra.mxu0 %v435
    %626 = vmatpush.msra.mxu0 %v431
    %627 = vmatpush.msra.mxu0 %v427
    %628 = vmatpush.msra.mxu0 %v423
    %629 = vmatpush.msra.mxu0 %v419
    %630 = vmatpush.msra.mxu0 %v415
    %631 = vmatpush.msra.mxu0 %v411
    %632 = vmatpush.msra.mxu0 %v407
    %633 = vmatpush.msra.mxu0 %v403
    %634 = vmatpush.msra.mxu0 %v399
    %635 = vmatpush.msra.mxu0 %v395
    %636 = vmatpush.msra.mxu0 %v391
    %637 = vmatmul.f32.gmra.mxu0 %v132
    %v638 = vpop.f32.mrf.mxu0
    %v639 = vadd.f32 %v619, %v638
    %640 = vdwg.mxu0
    %641 = vmatpush.msra.mxu0 %v515
    %642 = vmatpush.msra.mxu0 %v511
    %643 = vmatpush.msra.mxu0 %v507
    %644 = vmatpush.msra.mxu0 %v503
    %645 = vmatpush.msra.mxu0 %v499
    %646 = vmatpush.msra.mxu0 %v495
    %647 = vmatpush.msra.mxu0 %v491
    %648 = vmatpush.msra.mxu0 %v487
    %649 = vmatpush.msra.mxu0 %v483
    %650 = vmatpush.msra.mxu0 %v479
    %651 = vmatpush.msra.mxu0 %v475
    %652 = vmatpush.msra.mxu0 %v471
    %653 = vmatpush.msra.mxu0 %v467
    %654 = vmatpush.msra.mxu0 %v463
    %655 = vmatpush.msra.mxu0 %v459
    %656 = vmatpush.msra.mxu0 %v455
    %657 = vmatmul.f32.gmra.mxu0 %v133
    %v658 = vpop.f32.mrf.mxu0
    %v659 = vadd.f32 %v639, %v658
    %660 = vdwg.mxu0
    %661 = vmatpush.msra.mxu0 0.0
    %662 = vmatpush.msra.mxu0 0.0
    %663 = vmatpush.msra.mxu0 0.0
    %664 = vmatpush.msra.mxu0 0.0
    %665 = vmatpush.msra.mxu0 0.0
    %666 = vmatpush.msra.mxu0 0.0
    %667 = vmatpush.msra.mxu0 0.0
    %668 = vmatpush.msra.mxu0 0.0
    %669 = vmatpush.msra.mxu0 0.0
    %670 = vmatpush.msra.mxu0 0.0
    %671 = vmatpush.msra.mxu0 0.0
    %672 = vmatpush.msra.mxu0 0.0
    %673 = vmatpush.msra.mxu0 0.0
    %674 = vmatpush.msra.mxu0 0.0
    %675 = vmatpush.msra.mxu0 %v523
    %676 = vmatpush.msra.mxu0 %v519
    %677 = vmatmul.f32.gmra.mxu0 %v539
    %v678 = vpop.f32.mrf.mxu0
    %v679 = vadd.f32 %v659, %v678
    %680 = vdwg.mxu0
    %681 = vmatpush.msra.mxu0 %v196
    %682 = vmatpush.msra.mxu0 %v192
    %683 = vmatpush.msra.mxu0 %v188
    %684 = vmatpush.msra.mxu0 %v184
    %685 = vmatpush.msra.mxu0 %v180
    %686 = vmatpush.msra.mxu0 %v176
    %687 = vmatpush.msra.mxu0 %v172
    %688 = vmatpush.msra.mxu0 %v168
    %689 = vmatpush.msra.mxu0 %v164
    %690 = vmatpush.msra.mxu0 %v160
    %691 = vmatpush.msra.mxu0 %v156
    %692 = vmatpush.msra.mxu0 %v152
    %693 = vmatpush.msra.mxu0 %v148
    %694 = vmatpush.msra.mxu0 %v144
    %695 = vmatpush.msra.mxu0 %v140
    %696 = vmatpush.msra.mxu0 %v136
    %697 = vmatmul.f32.gmra.mxu0 %v128
    %v698 = vpop.f32.mrf.mxu0
    %v699 = vadd.f32 %v530, %v698
    %700 = vdwg.mxu0
    %701 = vmatpush.msra.mxu0 %v260
    %702 = vmatpush.msra.mxu0 %v256
    %703 = vmatpush.msra.mxu0 %v252
    %704 = vmatpush.msra.mxu0 %v248
    %705 = vmatpush.msra.mxu0 %v244
    %706 = vmatpush.msra.mxu0 %v240
    %707 = vmatpush.msra.mxu0 %v236
    %708 = vmatpush.msra.mxu0 %v232
    %709 = vmatpush.msra.mxu0 %v228
    %710 = vmatpush.msra.mxu0 %v224
    %711 = vmatpush.msra.mxu0 %v220
    %712 = vmatpush.msra.mxu0 %v216
    %713 = vmatpush.msra.mxu0 %v212
    %714 = vmatpush.msra.mxu0 %v208
    %715 = vmatpush.msra.mxu0 %v204
    %716 = vmatpush.msra.mxu0 %v200
    %717 = vmatmul.f32.gmra.mxu0 %v129
    %v718 = vpop.f32.mrf.mxu0
    %v719 = vadd.f32 %v699, %v718
    %720 = vdwg.mxu0
    %721 = vmatpush.msra.mxu0 %v324
    %722 = vmatpush.msra.mxu0 %v320
    %723 = vmatpush.msra.mxu0 %v316
    %724 = vmatpush.msra.mxu0 %v312
    %725 = vmatpush.msra.mxu0 %v308
    %726 = vmatpush.msra.mxu0 %v304
    %727 = vmatpush.msra.mxu0 %v300
    %728 = vmatpush.msra.mxu0 %v296
    %729 = vmatpush.msra.mxu0 %v292
    %730 = vmatpush.msra.mxu0 %v288
    %731 = vmatpush.msra.mxu0 %v284
    %732 = vmatpush.msra.mxu0 %v280
    %733 = vmatpush.msra.mxu0 %v276
    %734 = vmatpush.msra.mxu0 %v272
    %735 = vmatpush.msra.mxu0 %v268
    %736 = vmatpush.msra.mxu0 %v264
    %737 = vmatmul.f32.gmra.mxu0 %v130
    %v738 = vpop.f32.mrf.mxu0
    %v739 = vadd.f32 %v719, %v738
    %740 = vdwg.mxu0
    %741 = vmatpush.msra.mxu0 %v388
    %742 = vmatpush.msra.mxu0 %v384
    %743 = vmatpush.msra.mxu0 %v380
    %744 = vmatpush.msra.mxu0 %v376
    %745 = vmatpush.msra.mxu0 %v372
    %746 = vmatpush.msra.mxu0 %v368
    %747 = vmatpush.msra.mxu0 %v364
    %748 = vmatpush.msra.mxu0 %v360
    %749 = vmatpush.msra.mxu0 %v356
    %750 = vmatpush.msra.mxu0 %v352
    %751 = vmatpush.msra.mxu0 %v348
    %752 = vmatpush.msra.mxu0 %v344
    %753 = vmatpush.msra.mxu0 %v340
    %754 = vmatpush.msra.mxu0 %v336
    %755 = vmatpush.msra.mxu0 %v332
    %756 = vmatpush.msra.mxu0 %v328
    %757 = vmatmul.f32.gmra.mxu0 %v131
    %v758 = vpop.f32.mrf.mxu0
    %v759 = vadd.f32 %v739, %v758
    %760 = vdwg.mxu0
    %761 = vmatpush.msra.mxu0 %v452
    %762 = vmatpush.msra.mxu0 %v448
    %763 = vmatpush.msra.mxu0 %v444
    %764 = vmatpush.msra.mxu0 %v440
    %765 = vmatpush.msra.mxu0 %v436
    %766 = vmatpush.msra.mxu0 %v432
    %767 = vmatpush.msra.mxu0 %v428
    %768 = vmatpush.msra.mxu0 %v424
    %769 = vmatpush.msra.mxu0 %v420
    %770 = vmatpush.msra.mxu0 %v416
    %771 = vmatpush.msra.mxu0 %v412
    %772 = vmatpush.msra.mxu0 %v408
    %773 = vmatpush.msra.mxu0 %v404
    %774 = vmatpush.msra.mxu0 %v400
    %775 = vmatpush.msra.mxu0 %v396
    %776 = vmatpush.msra.mxu0 %v392
    %777 = vmatmul.f32.gmra.mxu0 %v132
    %v778 = vpop.f32.mrf.mxu0
    %v779 = vadd.f32 %v759, %v778
    %780 = vdwg.mxu0
    %781 = vmatpush.msra.mxu0 %v516
    %782 = vmatpush.msra.mxu0 %v512
    %783 = vmatpush.msra.mxu0 %v508
    %784 = vmatpush.msra.mxu0 %v504
    %785 = vmatpush.msra.mxu0 %v500
    %786 = vmatpush.msra.mxu0 %v496
    %787 = vmatpush.msra.mxu0 %v492
    %788 = vmatpush.msra.mxu0 %v488
    %789 = vmatpush.msra.mxu0 %v484
    %790 = vmatpush.msra.mxu0 %v480
    %791 = vmatpush.msra.mxu0 %v476
    %792 = vmatpush.msra.mxu0 %v472
    %793 = vmatpush.msra.mxu0 %v468
    %794 = vmatpush.msra.mxu0 %v464
    %795 = vmatpush.msra.mxu0 %v460
    %796 = vmatpush.msra.mxu0 %v456
    %797 = vmatmul.f32.gmra.mxu0 %v133
    %v798 = vpop.f32.mrf.mxu0
    %v799 = vadd.f32 %v779, %v798
    %800 = vdwg.mxu0
    %801 = vmatpush.msra.mxu0 0.0
    %802 = vmatpush.msra.mxu0 0.0
    %803 = vmatpush.msra.mxu0 0.0
    %804 = vmatpush.msra.mxu0 0.0
    %805 = vmatpush.msra.mxu0 0.0
    %806 = vmatpush.msra.mxu0 0.0
    %807 = vmatpush.msra.mxu0 0.0
    %808 = vmatpush.msra.mxu0 0.0
    %809 = vmatpush.msra.mxu0 0.0
    %810 = vmatpush.msra.mxu0 0.0
    %811 = vmatpush.msra.mxu0 0.0
    %812 = vmatpush.msra.mxu0 0.0
    %813 = vmatpush.msra.mxu0 0.0
    %814 = vmatpush.msra.mxu0 0.0
    %815 = vmatpush.msra.mxu0 %v524
    %816 = vmatpush.msra.mxu0 %v520
    %817 = vmatmul.f32.gmra.mxu0 %v539
    %v818 = vpop.f32.mrf.mxu0
    %v819 = vadd.f32 %v799, %v818
    %820 = vdwg.mxu0
    %821 = vmatpush.msra.mxu0 %v197
    %822 = vmatpush.msra.mxu0 %v193
    %823 = vmatpush.msra.mxu0 %v189
    %824 = vmatpush.msra.mxu0 %v185
    %825 = vmatpush.msra.mxu0 %v181
    %826 = vmatpush.msra.mxu0 %v177
    %827 = vmatpush.msra.mxu0 %v173
    %828 = vmatpush.msra.mxu0 %v169
    %829 = vmatpush.msra.mxu0 %v165
    %830 = vmatpush.msra.mxu0 %v161
    %831 = vmatpush.msra.mxu0 %v157
    %832 = vmatpush.msra.mxu0 %v153
    %833 = vmatpush.msra.mxu0 %v149
    %834 = vmatpush.msra.mxu0 %v145
    %835 = vmatpush.msra.mxu0 %v141
    %836 = vmatpush.msra.mxu0 %v137
    %837 = vmatmul.f32.gmra.mxu0 %v128
    %v838 = vpop.f32.mrf.mxu0
    %v839 = vadd.f32 %v531, %v838
    %840 = vdwg.mxu0
    %841 = vmatpush.msra.mxu0 %v261
    %842 = vmatpush.msra.mxu0 %v257
    %843 = vmatpush.msra.mxu0 %v253
    %844 = vmatpush.msra.mxu0 %v249
    %845 = vmatpush.msra.mxu0 %v245
    %846 = vmatpush.msra.mxu0 %v241
    %847 = vmatpush.msra.mxu0 %v237
    %848 = vmatpush.msra.mxu0 %v233
    %849 = vmatpush.msra.mxu0 %v229
    %850 = vmatpush.msra.mxu0 %v225
    %851 = vmatpush.msra.mxu0 %v221
    %852 = vmatpush.msra.mxu0 %v217
    %853 = vmatpush.msra.mxu0 %v213
    %854 = vmatpush.msra.mxu0 %v209
    %855 = vmatpush.msra.mxu0 %v205
    %856 = vmatpush.msra.mxu0 %v201
    %857 = vmatmul.f32.gmra.mxu0 %v129
    %v858 = vpop.f32.mrf.mxu0
    %v859 = vadd.f32 %v839, %v858
    %860 = vdwg.mxu0
    %861 = vmatpush.msra.mxu0 %v325
    %862 = vmatpush.msra.mxu0 %v321
    %863 = vmatpush.msra.mxu0 %v317
    %864 = vmatpush.msra.mxu0 %v313
    %865 = vmatpush.msra.mxu0 %v309
    %866 = vmatpush.msra.mxu0 %v305
    %867 = vmatpush.msra.mxu0 %v301
    %868 = vmatpush.msra.mxu0 %v297
    %869 = vmatpush.msra.mxu0 %v293
    %870 = vmatpush.msra.mxu0 %v289
    %871 = vmatpush.msra.mxu0 %v285
    %872 = vmatpush.msra.mxu0 %v281
    %873 = vmatpush.msra.mxu0 %v277
    %874 = vmatpush.msra.mxu0 %v273
    %875 = vmatpush.msra.mxu0 %v269
    %876 = vmatpush.msra.mxu0 %v265
    %877 = vmatmul.f32.gmra.mxu0 %v130
    %v878 = vpop.f32.mrf.mxu0
    %v879 = vadd.f32 %v859, %v878
    %880 = vdwg.mxu0
    %881 = vmatpush.msra.mxu0 %v389
    %882 = vmatpush.msra.mxu0 %v385
    %883 = vmatpush.msra.mxu0 %v381
    %884 = vmatpush.msra.mxu0 %v377
    %885 = vmatpush.msra.mxu0 %v373
    %886 = vmatpush.msra.mxu0 %v369
    %887 = vmatpush.msra.mxu0 %v365
    %888 = vmatpush.msra.mxu0 %v361
    %889 = vmatpush.msra.mxu0 %v357
    %890 = vmatpush.msra.mxu0 %v353
    %891 = vmatpush.msra.mxu0 %v349
    %892 = vmatpush.msra.mxu0 %v345
    %893 = vmatpush.msra.mxu0 %v341
    %894 = vmatpush.msra.mxu0 %v337
    %895 = vmatpush.msra.mxu0 %v333
    %896 = vmatpush.msra.mxu0 %v329
    %897 = vmatmul.f32.gmra.mxu0 %v131
    %v898 = vpop.f32.mrf.mxu0
    %v899 = vadd.f32 %v879, %v898
    %900 = vdwg.mxu0
    %901 = vmatpush.msra.mxu0 %v453
    %902 = vmatpush.msra.mxu0 %v449
    %903 = vmatpush.msra.mxu0 %v445
    %904 = vmatpush.msra.mxu0 %v441
    %905 = vmatpush.msra.mxu0 %v437
    %906 = vmatpush.msra.mxu0 %v433
    %907 = vmatpush.msra.mxu0 %v429
    %908 = vmatpush.msra.mxu0 %v425
    %909 = vmatpush.msra.mxu0 %v421
    %910 = vmatpush.msra.mxu0 %v417
    %911 = vmatpush.msra.mxu0 %v413
    %912 = vmatpush.msra.mxu0 %v409
    %913 = vmatpush.msra.mxu0 %v405
    %914 = vmatpush.msra.mxu0 %v401
    %915 = vmatpush.msra.mxu0 %v397
    %916 = vmatpush.msra.mxu0 %v393
    %917 = vmatmul.f32.gmra.mxu0 %v132
    %v918 = vpop.f32.mrf.mxu0
    %v919 = vadd.f32 %v899, %v918
    %920 = vdwg.mxu0
    %921 = vmatpush.msra.mxu0 %v517
    %922 = vmatpush.msra.mxu0 %v513
    %923 = vmatpush.msra.mxu0 %v509
    %924 = vmatpush.msra.mxu0 %v505
    %925 = vmatpush.msra.mxu0 %v501
    %926 = vmatpush.msra.mxu0 %v497
    %927 = vmatpush.msra.mxu0 %v493
    %928 = vmatpush.msra.mxu0 %v489
    %929 = vmatpush.msra.mxu0 %v485
    %930 = vmatpush.msra.mxu0 %v481
    %931 = vmatpush.msra.mxu0 %v477
    %932 = vmatpush.msra.mxu0 %v473
    %933 = vmatpush.msra.mxu0 %v469
    %934 = vmatpush.msra.mxu0 %v465
    %935 = vmatpush.msra.mxu0 %v461
    %936 = vmatpush.msra.mxu0 %v457
    %937 = vmatmul.f32.gmra.mxu0 %v133
    %v938 = vpop.f32.mrf.mxu0
    %v939 = vadd.f32 %v919, %v938
    %940 = vdwg.mxu0
    %941 = vmatpush.msra.mxu0 0.0
    %942 = vmatpush.msra.mxu0 0.0
    %943 = vmatpush.msra.mxu0 0.0
    %944 = vmatpush.msra.mxu0 0.0
    %945 = vmatpush.msra.mxu0 0.0
    %946 = vmatpush.msra.mxu0 0.0
    %947 = vmatpush.msra.mxu0 0.0
    %948 = vmatpush.msra.mxu0 0.0
    %949 = vmatpush.msra.mxu0 0.0
    %950 = vmatpush.msra.mxu0 0.0
    %951 = vmatpush.msra.mxu0 0.0
    %952 = vmatpush.msra.mxu0 0.0
    %953 = vmatpush.msra.mxu0 0.0
    %954 = vmatpush.msra.mxu0 0.0
    %955 = vmatpush.msra.mxu0 %v525
    %956 = vmatpush.msra.mxu0 %v521
    %957 = vmatmul.f32.gmra.mxu0 %v539
    %v958 = vpop.f32.mrf.mxu0
    %v959 = vadd.f32 %v939, %v958
    %960 = vdwg.mxu0
    %961 = vmatpush.msra.mxu0 %v198
    %962 = vmatpush.msra.mxu0 %v194
    %963 = vmatpush.msra.mxu0 %v190
    %964 = vmatpush.msra.mxu0 %v186
    %965 = vmatpush.msra.mxu0 %v182
    %966 = vmatpush.msra.mxu0 %v178
    %967 = vmatpush.msra.mxu0 %v174
    %968 = vmatpush.msra.mxu0 %v170
    %969 = vmatpush.msra.mxu0 %v166
    %970 = vmatpush.msra.mxu0 %v162
    %971 = vmatpush.msra.mxu0 %v158
    %972 = vmatpush.msra.mxu0 %v154
    %973 = vmatpush.msra.mxu0 %v150
    %974 = vmatpush.msra.mxu0 %v146
    %975 = vmatpush.msra.mxu0 %v142
    %976 = vmatpush.msra.mxu0 %v138
    %977 = vmatmul.f32.gmra.mxu0 %v128
    %v978 = vpop.f32.mrf.mxu0
    %v979 = vadd.f32 %v532, %v978
    %980 = vdwg.mxu0
    %981 = vmatpush.msra.mxu0 %v262
    %982 = vmatpush.msra.mxu0 %v258
    %983 = vmatpush.msra.mxu0 %v254
    %984 = vmatpush.msra.mxu0 %v250
    %985 = vmatpush.msra.mxu0 %v246
    %986 = vmatpush.msra.mxu0 %v242
    %987 = vmatpush.msra.mxu0 %v238
    %988 = vmatpush.msra.mxu0 %v234
    %989 = vmatpush.msra.mxu0 %v230
    %990 = vmatpush.msra.mxu0 %v226
    %991 = vmatpush.msra.mxu0 %v222
    %992 = vmatpush.msra.mxu0 %v218
    %993 = vmatpush.msra.mxu0 %v214
    %994 = vmatpush.msra.mxu0 %v210
    %995 = vmatpush.msra.mxu0 %v206
    %996 = vmatpush.msra.mxu0 %v202
    %997 = vmatmul.f32.gmra.mxu0 %v129
    %v998 = vpop.f32.mrf.mxu0
    %v999 = vadd.f32 %v979, %v998
    %1000 = vdwg.mxu0
    %1001 = vmatpush.msra.mxu0 %v326
    %1002 = vmatpush.msra.mxu0 %v322
    %1003 = vmatpush.msra.mxu0 %v318
    %1004 = vmatpush.msra.mxu0 %v314
    %1005 = vmatpush.msra.mxu0 %v310
    %1006 = vmatpush.msra.mxu0 %v306
    %1007 = vmatpush.msra.mxu0 %v302
    %1008 = vmatpush.msra.mxu0 %v298
    %1009 = vmatpush.msra.mxu0 %v294
    %1010 = vmatpush.msra.mxu0 %v290
    %1011 = vmatpush.msra.mxu0 %v286
    %1012 = vmatpush.msra.mxu0 %v282
    %1013 = vmatpush.msra.mxu0 %v278
    %1014 = vmatpush.msra.mxu0 %v274
    %1015 = vmatpush.msra.mxu0 %v270
    %1016 = vmatpush.msra.mxu0 %v266
    %1017 = vmatmul.f32.gmra.mxu0 %v130
    %v1018 = vpop.f32.mrf.mxu0
    %v1019 = vadd.f32 %v999, %v1018
    %1020 = vdwg.mxu0
    %1021 = vmatpush.msra.mxu0 %v390
    %1022 = vmatpush.msra.mxu0 %v386
    %1023 = vmatpush.msra.mxu0 %v382
    %1024 = vmatpush.msra.mxu0 %v378
    %1025 = vmatpush.msra.mxu0 %v374
    %1026 = vmatpush.msra.mxu0 %v370
    %1027 = vmatpush.msra.mxu0 %v366
    %1028 = vmatpush.msra.mxu0 %v362
    %1029 = vmatpush.msra.mxu0 %v358
    %1030 = vmatpush.msra.mxu0 %v354
    %1031 = vmatpush.msra.mxu0 %v350
    %1032 = vmatpush.msra.mxu0 %v346
    %1033 = vmatpush.msra.mxu0 %v342
    %1034 = vmatpush.msra.mxu0 %v338
    %1035 = vmatpush.msra.mxu0 %v334
    %1036 = vmatpush.msra.mxu0 %v330
    %1037 = vmatmul.f32.gmra.mxu0 %v131
    %v1038 = vpop.f32.mrf.mxu0
    %v1039 = vadd.f32 %v1019, %v1038
    %1040 = vdwg.mxu0
    %1041 = vmatpush.msra.mxu0 %v454
    %1042 = vmatpush.msra.mxu0 %v450
    %1043 = vmatpush.msra.mxu0 %v446
    %1044 = vmatpush.msra.mxu0 %v442
    %1045 = vmatpush.msra.mxu0 %v438
    %1046 = vmatpush.msra.mxu0 %v434
    %1047 = vmatpush.msra.mxu0 %v430
    %1048 = vmatpush.msra.mxu0 %v426
    %1049 = vmatpush.msra.mxu0 %v422
    %1050 = vmatpush.msra.mxu0 %v418
    %1051 = vmatpush.msra.mxu0 %v414
    %1052 = vmatpush.msra.mxu0 %v410
    %1053 = vmatpush.msra.mxu0 %v406
    %1054 = vmatpush.msra.mxu0 %v402
    %1055 = vmatpush.msra.mxu0 %v398
    %1056 = vmatpush.msra.mxu0 %v394
    %1057 = vmatmul.f32.gmra.mxu0 %v132
    %v1058 = vpop.f32.mrf.mxu0
    %v1059 = vadd.f32 %v1039, %v1058
    %1060 = vdwg.mxu0
    %1061 = vmatpush.msra.mxu0 %v518
    %1062 = vmatpush.msra.mxu0 %v514
    %1063 = vmatpush.msra.mxu0 %v510
    %1064 = vmatpush.msra.mxu0 %v506
    %1065 = vmatpush.msra.mxu0 %v502
    %1066 = vmatpush.msra.mxu0 %v498
    %1067 = vmatpush.msra.mxu0 %v494
    %1068 = vmatpush.msra.mxu0 %v490
    %1069 = vmatpush.msra.mxu0 %v486
    %1070 = vmatpush.msra.mxu0 %v482
    %1071 = vmatpush.msra.mxu0 %v478
    %1072 = vmatpush.msra.mxu0 %v474
    %1073 = vmatpush.msra.mxu0 %v470
    %1074 = vmatpush.msra.mxu0 %v466
    %1075 = vmatpush.msra.mxu0 %v462
    %1076 = vmatpush.msra.mxu0 %v458
    %1077 = vmatmul.f32.gmra.mxu0 %v133
    %v1078 = vpop.f32.mrf.mxu0
    %v1079 = vadd.f32 %v1059, %v1078
    %1080 = vdwg.mxu0
    %1081 = vmatpush.msra.mxu0 0.0
    %1082 = vmatpush.msra.mxu0 0.0
    %1083 = vmatpush.msra.mxu0 0.0
    %1084 = vmatpush.msra.mxu0 0.0
    %1085 = vmatpush.msra.mxu0 0.0
    %1086 = vmatpush.msra.mxu0 0.0
    %1087 = vmatpush.msra.mxu0 0.0
    %1088 = vmatpush.msra.mxu0 0.0
    %1089 = vmatpush.msra.mxu0 0.0
    %1090 = vmatpush.msra.mxu0 0.0
    %1091 = vmatpush.msra.mxu0 0.0
    %1092 = vmatpush.msra.mxu0 0.0
    %1093 = vmatpush.msra.mxu0 0.0
    %1094 = vmatpush.msra.mxu0 0.0
    %1095 = vmatpush.msra.mxu0 %v526
    %1096 = vmatpush.msra.mxu0 %v522
    %1097 = vmatmul.f32.gmra.mxu0 %v539
    %v1098 = vpop.f32.mrf.mxu0
    %v1099 = vadd.f32 %v1079, %v1098
    %1100 = vdwg.mxu0
    %v1101 = vmax.f32 %v679, 0.0
    %v1102 = vmax.f32 %v819, 0.0
    %v1103 = vmax.f32 %v959, 0.0
    %v1104 = vmax.f32 %v1099, 0.0
    %v1105 = vld [vmem:[#allocation8] sm:$0xff]
    %v1106 = vld [vmem:[#allocation8 + $0x8] sm:$0xff]
    %v1107 = vld [vmem:[#allocation8 + $0x10] sm:$0xff]
    %v1108 = vld [vmem:[#allocation8 + $0x18] sm:$0xff]
    %v1109 = vld [vmem:[#allocation8 + $0x20] sm:$0xff]
    %v1110 = vld [vmem:[#allocation8 + $0x28] sm:$0xff]
    %v1111 = vld [vmem:[#allocation8 + $0x30] sm:$0xff]
    %v1112 = vld [vmem:[#allocation8 + $0x38] sm:$0xff]
    %v1113 = vld [vmem:[#allocation8 + $0x40] sm:$0xff]
    %v1114 = vld [vmem:[#allocation8 + $0x48] sm:$0xff]
    %v1115 = vld [vmem:[#allocation8 + $0x50] sm:$0xff]
    %v1116 = vld [vmem:[#allocation8 + $0x58] sm:$0xff]
    %v1117 = vld [vmem:[#allocation8 + $0x60] sm:$0xff]
    %v1118 = vld [vmem:[#allocation8 + $0x68] sm:$0xff]
    %v1119 = vld [vmem:[#allocation8 + $0x70] sm:$0xff]
    %v1120 = vld [vmem:[#allocation8 + $0x78] sm:$0xff]
    %v1121 = vld [vmem:[#allocation8 + $0x80] sm:$0xff]
    %v1122 = vld [vmem:[#allocation8 + $0x88] sm:$0xff]
    %v1123 = vld [vmem:[#allocation8 + $0x90] sm:$0xff]
    %v1124 = vld [vmem:[#allocation8 + $0x98] sm:$0xff]
    %v1125 = vld [vmem:[#allocation8 + $0xa0] sm:$0xff]
    %v1126 = vld [vmem:[#allocation8 + $0xa8] sm:$0xff]
    %v1127 = vld [vmem:[#allocation8 + $0xb0] sm:$0xff]
    %v1128 = vld [vmem:[#allocation8 + $0xb8] sm:$0xff]
    %v1129 = vld [vmem:[#allocation8 + $0xc0] sm:$0xff]
    %v1130 = vld [vmem:[#allocation8 + $0xc8] sm:$0xff]
    %v1131 = vld [vmem:[#allocation8 + $0xd0] sm:$0xff]
    %v1132 = vld [vmem:[#allocation8 + $0xd8] sm:$0xff]
    %v1133 = vld [vmem:[#allocation8 + $0xe0] sm:$0xff]
    %v1134 = vld [vmem:[#allocation8 + $0xe8] sm:$0xff]
    %v1135 = vld [vmem:[#allocation8 + $0xf0] sm:$0xff]
    %v1136 = vld [vmem:[#allocation8 + $0xf8] sm:$0xff]
    %v1137 = vld [vmem:[#allocation8 + $0x100] sm:$0xff]
    %v1138 = vld [vmem:[#allocation8 + $0x108] sm:$0xff]
    %v1139 = vld [vmem:[#allocation8 + $0x110] sm:$0xff]
    %v1140 = vld [vmem:[#allocation8 + $0x118] sm:$0xff]
    %v1141 = vld [vmem:[#allocation8 + $0x120] sm:$0xff]
    %v1142 = vld [vmem:[#allocation8 + $0x128] sm:$0xff]
    %v1143 = vld [vmem:[#allocation8 + $0x130] sm:$0xff]
    %v1144 = vld [vmem:[#allocation8 + $0x138] sm:$0xff]
    %v1145 = vld [vmem:[#allocation8 + $0x140] sm:$0xff]
    %v1146 = vld [vmem:[#allocation8 + $0x148] sm:$0xff]
    %v1147 = vld [vmem:[#allocation8 + $0x150] sm:$0xff]
    %v1148 = vld [vmem:[#allocation8 + $0x158] sm:$0xff]
    %v1149 = vld [vmem:[#allocation8 + $0x160] sm:$0xff]
    %v1150 = vld [vmem:[#allocation8 + $0x168] sm:$0xff]
    %v1151 = vld [vmem:[#allocation8 + $0x170] sm:$0xff]
    %v1152 = vld [vmem:[#allocation8 + $0x178] sm:$0xff]
    %v1153 = vld [vmem:[#allocation8 + $0x180] sm:$0xff]
    %v1154 = vld [vmem:[#allocation8 + $0x188] sm:$0xff]
    %v1155 = vld [vmem:[#allocation8 + $0x190] sm:$0xff]
    %v1156 = vld [vmem:[#allocation8 + $0x198] sm:$0xff]
    %v1157 = vld [vmem:[#allocation8 + $0x1a0] sm:$0xff]
    %v1158 = vld [vmem:[#allocation8 + $0x1a8] sm:$0xff]
    %v1159 = vld [vmem:[#allocation8 + $0x1b0] sm:$0xff]
    %v1160 = vld [vmem:[#allocation8 + $0x1b8] sm:$0xff]
    %v1161 = vld [vmem:[#allocation8 + $0x1c0] sm:$0xff]
    %v1162 = vld [vmem:[#allocation8 + $0x1c8] sm:$0xff]
    %v1163 = vld [vmem:[#allocation8 + $0x1d0] sm:$0xff]
    %v1164 = vld [vmem:[#allocation8 + $0x1d8] sm:$0xff]
    %v1165 = vld [vmem:[#allocation8 + $0x1e0] sm:$0xff]
    %v1166 = vld [vmem:[#allocation8 + $0x1e8] sm:$0xff]
    %v1167 = vld [vmem:[#allocation8 + $0x1f0] sm:$0xff]
    %v1168 = vld [vmem:[#allocation8 + $0x1f8] sm:$0xff]
    %v1169 = vld [vmem:[#allocation8 + $0x200] sm:$0xff]
    %v1170 = vld [vmem:[#allocation8 + $0x208] sm:$0xff]
    %v1171 = vld [vmem:[#allocation8 + $0x210] sm:$0xff]
    %v1172 = vld [vmem:[#allocation8 + $0x218] sm:$0xff]
    %v1173 = vld [vmem:[#allocation8 + $0x220] sm:$0xff]
    %v1174 = vld [vmem:[#allocation8 + $0x228] sm:$0xff]
    %v1175 = vld [vmem:[#allocation8 + $0x230] sm:$0xff]
    %v1176 = vld [vmem:[#allocation8 + $0x238] sm:$0xff]
    %v1177 = vld [vmem:[#allocation8 + $0x240] sm:$0xff]
    %v1178 = vld [vmem:[#allocation8 + $0x248] sm:$0xff]
    %v1179 = vld [vmem:[#allocation8 + $0x250] sm:$0xff]
    %v1180 = vld [vmem:[#allocation8 + $0x258] sm:$0xff]
    %v1181 = vld [vmem:[#allocation8 + $0x260] sm:$0xff]
    %v1182 = vld [vmem:[#allocation8 + $0x268] sm:$0xff]
    %v1183 = vld [vmem:[#allocation8 + $0x270] sm:$0xff]
    %v1184 = vld [vmem:[#allocation8 + $0x278] sm:$0xff]
    %v1185 = vld [vmem:[#allocation8 + $0x280] sm:$0xff]
    %v1186 = vld [vmem:[#allocation8 + $0x288] sm:$0xff]
    %v1187 = vld [vmem:[#allocation8 + $0x290] sm:$0xff]
    %v1188 = vld [vmem:[#allocation8 + $0x298] sm:$0xff]
    %v1189 = vld [vmem:[#allocation8 + $0x2a0] sm:$0xff]
    %v1190 = vld [vmem:[#allocation8 + $0x2a8] sm:$0xff]
    %v1191 = vld [vmem:[#allocation8 + $0x2b0] sm:$0xff]
    %v1192 = vld [vmem:[#allocation8 + $0x2b8] sm:$0xff]
    %v1193 = vld [vmem:[#allocation8 + $0x2c0] sm:$0xff]
    %v1194 = vld [vmem:[#allocation8 + $0x2c8] sm:$0xff]
    %v1195 = vld [vmem:[#allocation8 + $0x2d0] sm:$0xff]
    %v1196 = vld [vmem:[#allocation8 + $0x2d8] sm:$0xff]
    %v1197 = vld [vmem:[#allocation8 + $0x2e0] sm:$0xff]
    %v1198 = vld [vmem:[#allocation8 + $0x2e8] sm:$0xff]
    %v1199 = vld [vmem:[#allocation8 + $0x2f0] sm:$0xff]
    %v1200 = vld [vmem:[#allocation8 + $0x2f8] sm:$0xff]
    %v1201 = vld [vmem:[#allocation8 + $0x300] sm:$0xff]
    %v1202 = vld [vmem:[#allocation8 + $0x308] sm:$0xff]
    %v1203 = vld [vmem:[#allocation8 + $0x310] sm:$0xff]
    %v1204 = vld [vmem:[#allocation8 + $0x318] sm:$0xff]
    %v1205 = vld [vmem:[#allocation8 + $0x320] sm:$0xff]
    %v1206 = vld [vmem:[#allocation8 + $0x328] sm:$0xff]
    %v1207 = vld [vmem:[#allocation8 + $0x330] sm:$0xff]
    %v1208 = vld [vmem:[#allocation8 + $0x338] sm:$0xff]
    %v1209 = vld [vmem:[#allocation8 + $0x340] sm:$0xff]
    %v1210 = vld [vmem:[#allocation8 + $0x348] sm:$0xff]
    %v1211 = vld [vmem:[#allocation8 + $0x350] sm:$0xff]
    %v1212 = vld [vmem:[#allocation8 + $0x358] sm:$0xff]
    %v1213 = vld [vmem:[#allocation8 + $0x360] sm:$0xff]
    %v1214 = vld [vmem:[#allocation8 + $0x368] sm:$0xff]
    %v1215 = vld [vmem:[#allocation8 + $0x370] sm:$0xff]
    %v1216 = vld [vmem:[#allocation8 + $0x378] sm:$0xff]
    %v1217 = vld [vmem:[#allocation8 + $0x380] sm:$0xff]
    %v1218 = vld [vmem:[#allocation8 + $0x388] sm:$0xff]
    %v1219 = vld [vmem:[#allocation8 + $0x390] sm:$0xff]
    %v1220 = vld [vmem:[#allocation8 + $0x398] sm:$0xff]
    %v1221 = vld [vmem:[#allocation8 + $0x3a0] sm:$0xff]
    %v1222 = vld [vmem:[#allocation8 + $0x3a8] sm:$0xff]
    %v1223 = vld [vmem:[#allocation8 + $0x3b0] sm:$0xff]
    %v1224 = vld [vmem:[#allocation8 + $0x3b8] sm:$0xff]
    %v1225 = vld [vmem:[#allocation8 + $0x3c0] sm:$0xff]
    %v1226 = vld [vmem:[#allocation8 + $0x3c8] sm:$0xff]
    %v1227 = vld [vmem:[#allocation8 + $0x3d0] sm:$0xff]
    %v1228 = vld [vmem:[#allocation8 + $0x3d8] sm:$0xff]
    %v1229 = vld [vmem:[#allocation8 + $0x3e0] sm:$0xff]
    %v1230 = vld [vmem:[#allocation8 + $0x3e8] sm:$0xff]
    %v1231 = vld [vmem:[#allocation8 + $0x3f0] sm:$0xff]
    %v1232 = vld [vmem:[#allocation8 + $0x3f8] sm:$0xff]
    %v1233 = vld [vmem:[#allocation8 + $0x400] sm:$0xff]
    %v1234 = vld [vmem:[#allocation8 + $0x408] sm:$0xff]
    %v1235 = vld [vmem:[#allocation8 + $0x410] sm:$0xff]
    %v1236 = vld [vmem:[#allocation8 + $0x418] sm:$0xff]
    %v1237 = vld [vmem:[#allocation8 + $0x420] sm:$0xff]
    %v1238 = vld [vmem:[#allocation8 + $0x428] sm:$0xff]
    %v1239 = vld [vmem:[#allocation8 + $0x430] sm:$0xff]
    %v1240 = vld [vmem:[#allocation8 + $0x438] sm:$0xff]
    %v1241 = vld [vmem:[#allocation8 + $0x440] sm:$0xff]
    %v1242 = vld [vmem:[#allocation8 + $0x448] sm:$0xff]
    %v1243 = vld [vmem:[#allocation8 + $0x450] sm:$0xff]
    %v1244 = vld [vmem:[#allocation8 + $0x458] sm:$0xff]
    %v1245 = vld [vmem:[#allocation8 + $0x460] sm:$0xff]
    %v1246 = vld [vmem:[#allocation8 + $0x468] sm:$0xff]
    %v1247 = vld [vmem:[#allocation8 + $0x470] sm:$0xff]
    %v1248 = vld [vmem:[#allocation8 + $0x478] sm:$0xff]
    %v1249 = vld [vmem:[#allocation8 + $0x480] sm:$0xff]
    %v1250 = vld [vmem:[#allocation8 + $0x488] sm:$0xff]
    %v1251 = vld [vmem:[#allocation8 + $0x490] sm:$0xff]
    %v1252 = vld [vmem:[#allocation8 + $0x498] sm:$0xff]
    %v1253 = vld [vmem:[#allocation8 + $0x4a0] sm:$0xff]
    %v1254 = vld [vmem:[#allocation8 + $0x4a8] sm:$0xff]
    %v1255 = vld [vmem:[#allocation8 + $0x4b0] sm:$0xff]
    %v1256 = vld [vmem:[#allocation8 + $0x4b8] sm:$0xff]
    %v1257 = vld [vmem:[#allocation8 + $0x4c0] sm:$0xff]
    %v1258 = vld [vmem:[#allocation8 + $0x4c8] sm:$0xff]
    %v1259 = vld [vmem:[#allocation8 + $0x4d0] sm:$0xff]
    %v1260 = vld [vmem:[#allocation8 + $0x4d8] sm:$0xff]
    %v1261 = vld [vmem:[#allocation8 + $0x4e0] sm:$0xff]
    %v1262 = vld [vmem:[#allocation8 + $0x4e8] sm:$0xff]
    %v1263 = vld [vmem:[#allocation8 + $0x4f0] sm:$0xff]
    %v1264 = vld [vmem:[#allocation8 + $0x4f8] sm:$0xff]
    %v1265 = vld [vmem:[#allocation8 + $0x500] sm:$0xff]
    %v1266 = vld [vmem:[#allocation8 + $0x508] sm:$0xff]
    %v1267 = vld [vmem:[#allocation8 + $0x510] sm:$0xff]
    %v1268 = vld [vmem:[#allocation8 + $0x518] sm:$0xff]
    %v1269 = vld [vmem:[#allocation8 + $0x520] sm:$0xff]
    %v1270 = vld [vmem:[#allocation8 + $0x528] sm:$0xff]
    %v1271 = vld [vmem:[#allocation8 + $0x530] sm:$0xff]
    %v1272 = vld [vmem:[#allocation8 + $0x538] sm:$0xff]
    %v1273 = vld [vmem:[#allocation8 + $0x540] sm:$0xff]
    %v1274 = vld [vmem:[#allocation8 + $0x548] sm:$0xff]
    %v1275 = vld [vmem:[#allocation8 + $0x550] sm:$0xff]
    %v1276 = vld [vmem:[#allocation8 + $0x558] sm:$0xff]
    %v1277 = vld [vmem:[#allocation8 + $0x560] sm:$0xff]
    %v1278 = vld [vmem:[#allocation8 + $0x568] sm:$0xff]
    %v1279 = vld [vmem:[#allocation8 + $0x570] sm:$0xff]
    %v1280 = vld [vmem:[#allocation8 + $0x578] sm:$0xff]
    %v1281 = vld [vmem:[#allocation8 + $0x580] sm:$0xff]
    %v1282 = vld [vmem:[#allocation8 + $0x588] sm:$0xff]
    %v1283 = vld [vmem:[#allocation8 + $0x590] sm:$0xff]
    %v1284 = vld [vmem:[#allocation8 + $0x598] sm:$0xff]
    %v1285 = vld [vmem:[#allocation8 + $0x5a0] sm:$0xff]
    %v1286 = vld [vmem:[#allocation8 + $0x5a8] sm:$0xff]
    %v1287 = vld [vmem:[#allocation8 + $0x5b0] sm:$0xff]
    %v1288 = vld [vmem:[#allocation8 + $0x5b8] sm:$0xff]
    %v1289 = vld [vmem:[#allocation8 + $0x5c0] sm:$0xff]
    %v1290 = vld [vmem:[#allocation8 + $0x5c8] sm:$0xff]
    %v1291 = vld [vmem:[#allocation8 + $0x5d0] sm:$0xff]
    %v1292 = vld [vmem:[#allocation8 + $0x5d8] sm:$0xff]
    %v1293 = vld [vmem:[#allocation8 + $0x5e0] sm:$0xff]
    %v1294 = vld [vmem:[#allocation8 + $0x5e8] sm:$0xff]
    %v1295 = vld [vmem:[#allocation8 + $0x5f0] sm:$0xff]
    %v1296 = vld [vmem:[#allocation8 + $0x5f8] sm:$0xff]
    %v1297 = vld [vmem:[#allocation8 + $0x600] sm:$0xff]
    %v1298 = vld [vmem:[#allocation8 + $0x608] sm:$0xff]
    %v1299 = vld [vmem:[#allocation8 + $0x610] sm:$0xff]
    %v1300 = vld [vmem:[#allocation8 + $0x618] sm:$0xff]
    %v1301 = vld [vmem:[#allocation8 + $0x620] sm:$0xff]
    %v1302 = vld [vmem:[#allocation8 + $0x628] sm:$0xff]
    %v1303 = vld [vmem:[#allocation8 + $0x630] sm:$0xff]
    %v1304 = vld [vmem:[#allocation8 + $0x638] sm:$0xff]
    %v1305 = vld [vmem:[#allocation8 + $0x640] sm:$0xff]
    %v1306 = vld [vmem:[#allocation8 + $0x648] sm:$0xff]
    %v1307 = vld [vmem:[#allocation8 + $0x650] sm:$0xff]
    %v1308 = vld [vmem:[#allocation8 + $0x658] sm:$0xff]
    %v1309 = vld [vmem:[#allocation8 + $0x660] sm:$0xff]
    %v1310 = vld [vmem:[#allocation8 + $0x668] sm:$0xff]
    %v1311 = vld [vmem:[#allocation8 + $0x670] sm:$0xff]
    %v1312 = vld [vmem:[#allocation8 + $0x678] sm:$0xff]
    %v1313 = vld [vmem:[#allocation8 + $0x680] sm:$0xff]
    %v1314 = vld [vmem:[#allocation8 + $0x688] sm:$0xff]
    %v1315 = vld [vmem:[#allocation8 + $0x690] sm:$0xff]
    %v1316 = vld [vmem:[#allocation8 + $0x698] sm:$0xff]
    %v1317 = vld [vmem:[#allocation8 + $0x6a0] sm:$0xff]
    %v1318 = vld [vmem:[#allocation8 + $0x6a8] sm:$0xff]
    %v1319 = vld [vmem:[#allocation8 + $0x6b0] sm:$0xff]
    %v1320 = vld [vmem:[#allocation8 + $0x6b8] sm:$0xff]
    %v1321 = vld [vmem:[#allocation8 + $0x6c0] sm:$0xff]
    %v1322 = vld [vmem:[#allocation8 + $0x6c8] sm:$0xff]
    %v1323 = vld [vmem:[#allocation8 + $0x6d0] sm:$0xff]
    %v1324 = vld [vmem:[#allocation8 + $0x6d8] sm:$0xff]
    %v1325 = vld [vmem:[#allocation8 + $0x6e0] sm:$0xff]
    %v1326 = vld [vmem:[#allocation8 + $0x6e8] sm:$0xff]
    %v1327 = vld [vmem:[#allocation8 + $0x6f0] sm:$0xff]
    %v1328 = vld [vmem:[#allocation8 + $0x6f8] sm:$0xff]
    %v1329 = vld [vmem:[#allocation8 + $0x700] sm:$0xff]
    %v1330 = vld [vmem:[#allocation8 + $0x708] sm:$0xff]
    %v1331 = vld [vmem:[#allocation8 + $0x710] sm:$0xff]
    %v1332 = vld [vmem:[#allocation8 + $0x718] sm:$0xff]
    %v1333 = vld [vmem:[#allocation8 + $0x720] sm:$0xff]
    %v1334 = vld [vmem:[#allocation8 + $0x728] sm:$0xff]
    %v1335 = vld [vmem:[#allocation8 + $0x730] sm:$0xff]
    %v1336 = vld [vmem:[#allocation8 + $0x738] sm:$0xff]
    %v1337 = vld [vmem:[#allocation8 + $0x740] sm:$0xff]
    %v1338 = vld [vmem:[#allocation8 + $0x748] sm:$0xff]
    %v1339 = vld [vmem:[#allocation8 + $0x750] sm:$0xff]
    %v1340 = vld [vmem:[#allocation8 + $0x758] sm:$0xff]
    %v1341 = vld [vmem:[#allocation8 + $0x760] sm:$0xff]
    %v1342 = vld [vmem:[#allocation8 + $0x768] sm:$0xff]
    %v1343 = vld [vmem:[#allocation8 + $0x770] sm:$0xff]
    %v1344 = vld [vmem:[#allocation8 + $0x778] sm:$0xff]
    %v1345 = vld [vmem:[#allocation8 + $0x780] sm:$0xff]
    %v1346 = vld [vmem:[#allocation8 + $0x788] sm:$0xff]
    %v1347 = vld [vmem:[#allocation8 + $0x790] sm:$0xff]
    %v1348 = vld [vmem:[#allocation8 + $0x798] sm:$0xff]
    %v1349 = vld [vmem:[#allocation8 + $0x7a0] sm:$0xff]
    %v1350 = vld [vmem:[#allocation8 + $0x7a8] sm:$0xff]
    %v1351 = vld [vmem:[#allocation8 + $0x7b0] sm:$0xff]
    %v1352 = vld [vmem:[#allocation8 + $0x7b8] sm:$0xff]
    %v1353 = vld [vmem:[#allocation8 + $0x7c0] sm:$0xff]
    %v1354 = vld [vmem:[#allocation8 + $0x7c8] sm:$0xff]
    %v1355 = vld [vmem:[#allocation8 + $0x7d0] sm:$0xff]
    %v1356 = vld [vmem:[#allocation8 + $0x7d8] sm:$0xff]
    %v1357 = vld [vmem:[#allocation8 + $0x7e0] sm:$0xff]
    %v1358 = vld [vmem:[#allocation8 + $0x7e8] sm:$0xff]
    %v1359 = vld [vmem:[#allocation8 + $0x7f0] sm:$0xff]
    %v1360 = vld [vmem:[#allocation8 + $0x7f8] sm:$0xff]
    %v1361 = vld [vmem:[#allocation10] sm:$0xf]
    %v1363 = vperm.slane %v1361, 0
    %v1364 = vperm.slane %v1361, 1
    %v1365 = vperm.slane %v1361, 2
    %v1366 = vperm.slane %v1361, 3
    %1371 = vmatpush.msra.mxu0 %v1165
    %1372 = vmatpush.msra.mxu0 %v1161
    %1373 = vmatpush.msra.mxu0 %v1157
    %1374 = vmatpush.msra.mxu0 %v1153
    %1375 = vmatpush.msra.mxu0 %v1149
    %1376 = vmatpush.msra.mxu0 %v1145
    %1377 = vmatpush.msra.mxu0 %v1141
    %1378 = vmatpush.msra.mxu0 %v1137
    %1379 = vmatpush.msra.mxu0 %v1133
    %1380 = vmatpush.msra.mxu0 %v1129
    %1381 = vmatpush.msra.mxu0 %v1125
    %1382 = vmatpush.msra.mxu0 %v1121
    %1383 = vmatpush.msra.mxu0 %v1117
    %1384 = vmatpush.msra.mxu0 %v1113
    %1385 = vmatpush.msra.mxu0 %v1109
    %1386 = vmatpush.msra.mxu0 %v1105
    %1387 = vmatmul.f32.gmra.mxu0 %v1101
    %v1388 = vpop.f32.mrf.mxu0
    %v1389 = vadd.f32 %v1363, %v1388
    %1390 = vdwg.mxu0
    %1391 = vmatpush.msra.mxu0 %v1229
    %1392 = vmatpush.msra.mxu0 %v1225
    %1393 = vmatpush.msra.mxu0 %v1221
    %1394 = vmatpush.msra.mxu0 %v1217
    %1395 = vmatpush.msra.mxu0 %v1213
    %1396 = vmatpush.msra.mxu0 %v1209
    %1397 = vmatpush.msra.mxu0 %v1205
    %1398 = vmatpush.msra.mxu0 %v1201
    %1399 = vmatpush.msra.mxu0 %v1197
    %1400 = vmatpush.msra.mxu0 %v1193
    %1401 = vmatpush.msra.mxu0 %v1189
    %1402 = vmatpush.msra.mxu0 %v1185
    %1403 = vmatpush.msra.mxu0 %v1181
    %1404 = vmatpush.msra.mxu0 %v1177
    %1405 = vmatpush.msra.mxu0 %v1173
    %1406 = vmatpush.msra.mxu0 %v1169
    %1407 = vmatmul.f32.gmra.mxu0 %v1102
    %v1408 = vpop.f32.mrf.mxu0
    %v1409 = vadd.f32 %v1389, %v1408
    %1410 = vdwg.mxu0
    %1411 = vmatpush.msra.mxu0 %v1293
    %1412 = vmatpush.msra.mxu0 %v1289
    %1413 = vmatpush.msra.mxu0 %v1285
    %1414 = vmatpush.msra.mxu0 %v1281
    %1415 = vmatpush.msra.mxu0 %v1277
    %1416 = vmatpush.msra.mxu0 %v1273
    %1417 = vmatpush.msra.mxu0 %v1269
    %1418 = vmatpush.msra.mxu0 %v1265
    %1419 = vmatpush.msra.mxu0 %v1261
    %1420 = vmatpush.msra.mxu0 %v1257
    %1421 = vmatpush.msra.mxu0 %v1253
    %1422 = vmatpush.msra.mxu0 %v1249
    %1423 = vmatpush.msra.mxu0 %v1245
    %1424 = vmatpush.msra.mxu0 %v1241
    %1425 = vmatpush.msra.mxu0 %v1237
    %1426 = vmatpush.msra.mxu0 %v1233
    %1427 = vmatmul.f32.gmra.mxu0 %v1103
    %v1428 = vpop.f32.mrf.mxu0
    %v1429 = vadd.f32 %v1409, %v1428
    %1430 = vdwg.mxu0
    %1431 = vmatpush.msra.mxu0 %v1357
    %1432 = vmatpush.msra.mxu0 %v1353
    %1433 = vmatpush.msra.mxu0 %v1349
    %1434 = vmatpush.msra.mxu0 %v1345
    %1435 = vmatpush.msra.mxu0 %v1341
    %1436 = vmatpush.msra.mxu0 %v1337
    %1437 = vmatpush.msra.mxu0 %v1333
    %1438 = vmatpush.msra.mxu0 %v1329
    %1439 = vmatpush.msra.mxu0 %v1325
    %1440 = vmatpush.msra.mxu0 %v1321
    %1441 = vmatpush.msra.mxu0 %v1317
    %1442 = vmatpush.msra.mxu0 %v1313
    %1443 = vmatpush.msra.mxu0 %v1309
    %1444 = vmatpush.msra.mxu0 %v1305
    %1445 = vmatpush.msra.mxu0 %v1301
    %1446 = vmatpush.msra.mxu0 %v1297
    %1447 = vmatmul.f32.gmra.mxu0 %v1104
    %v1448 = vpop.f32.mrf.mxu0
    %v1449 = vadd.f32 %v1429, %v1448
    %1450 = vdwg.mxu0
    %1451 = vmatpush.msra.mxu0 %v1166
    %1452 = vmatpush.msra.mxu0 %v1162
    %1453 = vmatpush.msra.mxu0 %v1158
    %1454 = vmatpush.msra.mxu0 %v1154
    %1455 = vmatpush.msra.mxu0 %v1150
    %1456 = vmatpush.msra.mxu0 %v1146
    %1457 = vmatpush.msra.mxu0 %v1142
    %1458 = vmatpush.msra.mxu0 %v1138
    %1459 = vmatpush.msra.mxu0 %v1134
    %1460 = vmatpush.msra.mxu0 %v1130
    %1461 = vmatpush.msra.mxu0 %v1126
    %1462 = vmatpush.msra.mxu0 %v1122
    %1463 = vmatpush.msra.mxu0 %v1118
    %1464 = vmatpush.msra.mxu0 %v1114
    %1465 = vmatpush.msra.mxu0 %v1110
    %1466 = vmatpush.msra.mxu0 %v1106
    %1467 = vmatmul.f32.gmra.mxu0 %v1101
    %v1468 = vpop.f32.mrf.mxu0
    %v1469 = vadd.f32 %v1364, %v1468
    %1470 = vdwg.mxu0
    %1471 = vmatpush.msra.mxu0 %v1230
    %1472 = vmatpush.msra.mxu0 %v1226
    %1473 = vmatpush.msra.mxu0 %v1222
    %1474 = vmatpush.msra.mxu0 %v1218
    %1475 = vmatpush.msra.mxu0 %v1214
    %1476 = vmatpush.msra.mxu0 %v1210
    %1477 = vmatpush.msra.mxu0 %v1206
    %1478 = vmatpush.msra.mxu0 %v1202
    %1479 = vmatpush.msra.mxu0 %v1198
    %1480 = vmatpush.msra.mxu0 %v1194
    %1481 = vmatpush.msra.mxu0 %v1190
    %1482 = vmatpush.msra.mxu0 %v1186
    %1483 = vmatpush.msra.mxu0 %v1182
    %1484 = vmatpush.msra.mxu0 %v1178
    %1485 = vmatpush.msra.mxu0 %v1174
    %1486 = vmatpush.msra.mxu0 %v1170
    %1487 = vmatmul.f32.gmra.mxu0 %v1102
    %v1488 = vpop.f32.mrf.mxu0
    %v1489 = vadd.f32 %v1469, %v1488
    %1490 = vdwg.mxu0
    %1491 = vmatpush.msra.mxu0 %v1294
    %1492 = vmatpush.msra.mxu0 %v1290
    %1493 = vmatpush.msra.mxu0 %v1286
    %1494 = vmatpush.msra.mxu0 %v1282
    %1495 = vmatpush.msra.mxu0 %v1278
    %1496 = vmatpush.msra.mxu0 %v1274
    %1497 = vmatpush.msra.mxu0 %v1270
    %1498 = vmatpush.msra.mxu0 %v1266
    %1499 = vmatpush.msra.mxu0 %v1262
    %1500 = vmatpush.msra.mxu0 %v1258
    %1501 = vmatpush.msra.mxu0 %v1254
    %1502 = vmatpush.msra.mxu0 %v1250
    %1503 = vmatpush.msra.mxu0 %v1246
    %1504 = vmatpush.msra.mxu0 %v1242
    %1505 = vmatpush.msra.mxu0 %v1238
    %1506 = vmatpush.msra.mxu0 %v1234
    %1507 = vmatmul.f32.gmra.mxu0 %v1103
    %v1508 = vpop.f32.mrf.mxu0
    %v1509 = vadd.f32 %v1489, %v1508
    %1510 = vdwg.mxu0
    %1511 = vmatpush.msra.mxu0 %v1358
    %1512 = vmatpush.msra.mxu0 %v1354
    %1513 = vmatpush.msra.mxu0 %v1350
    %1514 = vmatpush.msra.mxu0 %v1346
    %1515 = vmatpush.msra.mxu0 %v1342
    %1516 = vmatpush.msra.mxu0 %v1338
    %1517 = vmatpush.msra.mxu0 %v1334
    %1518 = vmatpush.msra.mxu0 %v1330
    %1519 = vmatpush.msra.mxu0 %v1326
    %1520 = vmatpush.msra.mxu0 %v1322
    %1521 = vmatpush.msra.mxu0 %v1318
    %1522 = vmatpush.msra.mxu0 %v1314
    %1523 = vmatpush.msra.mxu0 %v1310
    %1524 = vmatpush.msra.mxu0 %v1306
    %1525 = vmatpush.msra.mxu0 %v1302
    %1526 = vmatpush.msra.mxu0 %v1298
    %1527 = vmatmul.f32.gmra.mxu0 %v1104
    %v1528 = vpop.f32.mrf.mxu0
    %v1529 = vadd.f32 %v1509, %v1528
    %1530 = vdwg.mxu0
    %1531 = vmatpush.msra.mxu0 %v1167
    %1532 = vmatpush.msra.mxu0 %v1163
    %1533 = vmatpush.msra.mxu0 %v1159
    %1534 = vmatpush.msra.mxu0 %v1155
    %1535 = vmatpush.msra.mxu0 %v1151
    %1536 = vmatpush.msra.mxu0 %v1147
    %1537 = vmatpush.msra.mxu0 %v1143
    %1538 = vmatpush.msra.mxu0 %v1139
    %1539 = vmatpush.msra.mxu0 %v1135
    %1540 = vmatpush.msra.mxu0 %v1131
    %1541 = vmatpush.msra.mxu0 %v1127
    %1542 = vmatpush.msra.mxu0 %v1123
    %1543 = vmatpush.msra.mxu0 %v1119
    %1544 = vmatpush.msra.mxu0 %v1115
    %1545 = vmatpush.msra.mxu0 %v1111
    %1546 = vmatpush.msra.mxu0 %v1107
    %1547 = vmatmul.f32.gmra.mxu0 %v1101
    %v1548 = vpop.f32.mrf.mxu0
    %v1549 = vadd.f32 %v1365, %v1548
    %1550 = vdwg.mxu0
    %1551 = vmatpush.msra.mxu0 %v1231
    %1552 = vmatpush.msra.mxu0 %v1227
    %1553 = vmatpush.msra.mxu0 %v1223
    %1554 = vmatpush.msra.mxu0 %v1219
    %1555 = vmatpush.msra.mxu0 %v1215
    %1556 = vmatpush.msra.mxu0 %v1211
    %1557 = vmatpush.msra.mxu0 %v1207
    %1558 = vmatpush.msra.mxu0 %v1203
    %1559 = vmatpush.msra.mxu0 %v1199
    %1560 = vmatpush.msra.mxu0 %v1195
    %1561 = vmatpush.msra.mxu0 %v1191
    %1562 = vmatpush.msra.mxu0 %v1187
    %1563 = vmatpush.msra.mxu0 %v1183
    %1564 = vmatpush.msra.mxu0 %v1179
    %1565 = vmatpush.msra.mxu0 %v1175
    %1566 = vmatpush.msra.mxu0 %v1171
    %1567 = vmatmul.f32.gmra.mxu0 %v1102
    %v1568 = vpop.f32.mrf.mxu0
    %v1569 = vadd.f32 %v1549, %v1568
    %1570 = vdwg.mxu0
    %1571 = vmatpush.msra.mxu0 %v1295
    %1572 = vmatpush.msra.mxu0 %v1291
    %1573 = vmatpush.msra.mxu0 %v1287
    %1574 = vmatpush.msra.mxu0 %v1283
    %1575 = vmatpush.msra.mxu0 %v1279
    %1576 = vmatpush.msra.mxu0 %v1275
    %1577 = vmatpush.msra.mxu0 %v1271
    %1578 = vmatpush.msra.mxu0 %v1267
    %1579 = vmatpush.msra.mxu0 %v1263
    %1580 = vmatpush.msra.mxu0 %v1259
    %1581 = vmatpush.msra.mxu0 %v1255
    %1582 = vmatpush.msra.mxu0 %v1251
    %1583 = vmatpush.msra.mxu0 %v1247
    %1584 = vmatpush.msra.mxu0 %v1243
    %1585 = vmatpush.msra.mxu0 %v1239
    %1586 = vmatpush.msra.mxu0 %v1235
    %1587 = vmatmul.f32.gmra.mxu0 %v1103
    %v1588 = vpop.f32.mrf.mxu0
    %v1589 = vadd.f32 %v1569, %v1588
    %1590 = vdwg.mxu0
    %1591 = vmatpush.msra.mxu0 %v1359
    %1592 = vmatpush.msra.mxu0 %v1355
    %1593 = vmatpush.msra.mxu0 %v1351
    %1594 = vmatpush.msra.mxu0 %v1347
    %1595 = vmatpush.msra.mxu0 %v1343
    %1596 = vmatpush.msra.mxu0 %v1339
    %1597 = vmatpush.msra.mxu0 %v1335
    %1598 = vmatpush.msra.mxu0 %v1331
    %1599 = vmatpush.msra.mxu0 %v1327
    %1600 = vmatpush.msra.mxu0 %v1323
    %1601 = vmatpush.msra.mxu0 %v1319
    %1602 = vmatpush.msra.mxu0 %v1315
    %1603 = vmatpush.msra.mxu0 %v1311
    %1604 = vmatpush.msra.mxu0 %v1307
    %1605 = vmatpush.msra.mxu0 %v1303
    %1606 = vmatpush.msra.mxu0 %v1299
    %1607 = vmatmul.f32.gmra.mxu0 %v1104
    %v1608 = vpop.f32.mrf.mxu0
    %v1609 = vadd.f32 %v1589, %v1608
    %1610 = vdwg.mxu0
    %1611 = vmatpush.msra.mxu0 %v1168
    %1612 = vmatpush.msra.mxu0 %v1164
    %1613 = vmatpush.msra.mxu0 %v1160
    %1614 = vmatpush.msra.mxu0 %v1156
    %1615 = vmatpush.msra.mxu0 %v1152
    %1616 = vmatpush.msra.mxu0 %v1148
    %1617 = vmatpush.msra.mxu0 %v1144
    %1618 = vmatpush.msra.mxu0 %v1140
    %1619 = vmatpush.msra.mxu0 %v1136
    %1620 = vmatpush.msra.mxu0 %v1132
    %1621 = vmatpush.msra.mxu0 %v1128
    %1622 = vmatpush.msra.mxu0 %v1124
    %1623 = vmatpush.msra.mxu0 %v1120
    %1624 = vmatpush.msra.mxu0 %v1116
    %1625 = vmatpush.msra.mxu0 %v1112
    %1626 = vmatpush.msra.mxu0 %v1108
    %1627 = vmatmul.f32.gmra.mxu0 %v1101
    %v1628 = vpop.f32.mrf.mxu0
    %v1629 = vadd.f32 %v1366, %v1628
    %1630 = vdwg.mxu0
    %1631 = vmatpush.msra.mxu0 %v1232
    %1632 = vmatpush.msra.mxu0 %v1228
    %1633 = vmatpush.msra.mxu0 %v1224
    %1634 = vmatpush.msra.mxu0 %v1220
    %1635 = vmatpush.msra.mxu0 %v1216
    %1636 = vmatpush.msra.mxu0 %v1212
    %1637 = vmatpush.msra.mxu0 %v1208
    %1638 = vmatpush.msra.mxu0 %v1204
    %1639 = vmatpush.msra.mxu0 %v1200
    %1640 = vmatpush.msra.mxu0 %v1196
    %1641 = vmatpush.msra.mxu0 %v1192
    %1642 = vmatpush.msra.mxu0 %v1188
    %1643 = vmatpush.msra.mxu0 %v1184
    %1644 = vmatpush.msra.mxu0 %v1180
    %1645 = vmatpush.msra.mxu0 %v1176
    %1646 = vmatpush.msra.mxu0 %v1172
    %1647 = vmatmul.f32.gmra.mxu0 %v1102
    %v1648 = vpop.f32.mrf.mxu0
    %v1649 = vadd.f32 %v1629, %v1648
    %1650 = vdwg.mxu0
    %1651 = vmatpush.msra.mxu0 %v1296
    %1652 = vmatpush.msra.mxu0 %v1292
    %1653 = vmatpush.msra.mxu0 %v1288
    %1654 = vmatpush.msra.mxu0 %v1284
    %1655 = vmatpush.msra.mxu0 %v1280
    %1656 = vmatpush.msra.mxu0 %v1276
    %1657 = vmatpush.msra.mxu0 %v1272
    %1658 = vmatpush.msra.mxu0 %v1268
    %1659 = vmatpush.msra.mxu0 %v1264
    %1660 = vmatpush.msra.mxu0 %v1260
    %1661 = vmatpush.msra.mxu0 %v1256
    %1662 = vmatpush.msra.mxu0 %v1252
    %1663 = vmatpush.msra.mxu0 %v1248
    %1664 = vmatpush.msra.mxu0 %v1244
    %1665 = vmatpush.msra.mxu0 %v1240
    %1666 = vmatpush.msra.mxu0 %v1236
    %1667 = vmatmul.f32.gmra.mxu0 %v1103
    %v1668 = vpop.f32.mrf.mxu0
    %v1669 = vadd.f32 %v1649, %v1668
    %1670 = vdwg.mxu0
    %1671 = vmatpush.msra.mxu0 %v1360
    %1672 = vmatpush.msra.mxu0 %v1356
    %1673 = vmatpush.msra.mxu0 %v1352
    %1674 = vmatpush.msra.mxu0 %v1348
    %1675 = vmatpush.msra.mxu0 %v1344
    %1676 = vmatpush.msra.mxu0 %v1340
    %1677 = vmatpush.msra.mxu0 %v1336
    %1678 = vmatpush.msra.mxu0 %v1332
    %1679 = vmatpush.msra.mxu0 %v1328
    %1680 = vmatpush.msra.mxu0 %v1324
    %1681 = vmatpush.msra.mxu0 %v1320
    %1682 = vmatpush.msra.mxu0 %v1316
    %1683 = vmatpush.msra.mxu0 %v1312
    %1684 = vmatpush.msra.mxu0 %v1308
    %1685 = vmatpush.msra.mxu0 %v1304
    %1686 = vmatpush.msra.mxu0 %v1300
    %1687 = vmatmul.f32.gmra.mxu0 %v1104
    %v1688 = vpop.f32.mrf.mxu0
    %v1689 = vadd.f32 %v1669, %v1688
    %1690 = vdwg.mxu0
    %v1691 = vmax.f32 %v1449, 0.0
    %v1692 = vmax.f32 %v1529, 0.0
    %v1693 = vmax.f32 %v1609, 0.0
    %v1694 = vmax.f32 %v1689, 0.0
    %v1695 = vld [vmem:[#allocation11] sm:$0xff]
    %v1696 = vld [vmem:[#allocation11 + $0x8] sm:$0xff]
    %v1697 = vld [vmem:[#allocation11 + $0x10] sm:$0xff]
    %v1698 = vld [vmem:[#allocation11 + $0x18] sm:$0xff]
    %v1699 = vld [vmem:[#allocation11 + $0x20] sm:$0xff]
    %v1700 = vld [vmem:[#allocation11 + $0x28] sm:$0xff]
    %v1701 = vld [vmem:[#allocation11 + $0x30] sm:$0xff]
    %v1702 = vld [vmem:[#allocation11 + $0x38] sm:$0xff]
    %v1703 = vld [vmem:[#allocation11 + $0x40] sm:$0xff]
    %v1704 = vld [vmem:[#allocation11 + $0x48] sm:$0xff]
    %v1705 = vld [vmem:[#allocation11 + $0x50] sm:$0xff]
    %v1706 = vld [vmem:[#allocation11 + $0x58] sm:$0xff]
    %v1707 = vld [vmem:[#allocation11 + $0x60] sm:$0xff]
    %v1708 = vld [vmem:[#allocation11 + $0x68] sm:$0xff]
    %v1709 = vld [vmem:[#allocation11 + $0x70] sm:$0xff]
    %v1710 = vld [vmem:[#allocation11 + $0x78] sm:$0xff]
    %v1711 = vld [vmem:[#allocation11 + $0x80] sm:$0xff]
    %v1712 = vld [vmem:[#allocation11 + $0x88] sm:$0xff]
    %v1713 = vld [vmem:[#allocation11 + $0x90] sm:$0xff]
    %v1714 = vld [vmem:[#allocation11 + $0x98] sm:$0xff]
    %v1715 = vld [vmem:[#allocation11 + $0xa0] sm:$0xff]
    %v1716 = vld [vmem:[#allocation11 + $0xa8] sm:$0xff]
    %v1717 = vld [vmem:[#allocation11 + $0xb0] sm:$0xff]
    %v1718 = vld [vmem:[#allocation11 + $0xb8] sm:$0xff]
    %v1719 = vld [vmem:[#allocation11 + $0xc0] sm:$0xff]
    %v1720 = vld [vmem:[#allocation11 + $0xc8] sm:$0xff]
    %v1721 = vld [vmem:[#allocation11 + $0xd0] sm:$0xff]
    %v1722 = vld [vmem:[#allocation11 + $0xd8] sm:$0xff]
    %v1723 = vld [vmem:[#allocation11 + $0xe0] sm:$0xff]
    %v1724 = vld [vmem:[#allocation11 + $0xe8] sm:$0xff]
    %v1725 = vld [vmem:[#allocation11 + $0xf0] sm:$0xff]
    %v1726 = vld [vmem:[#allocation11 + $0xf8] sm:$0xff]
    %v1727 = vld [vmem:[#allocation11 + $0x100] sm:$0xff]
    %v1728 = vld [vmem:[#allocation11 + $0x108] sm:$0xff]
    %v1729 = vld [vmem:[#allocation11 + $0x110] sm:$0xff]
    %v1730 = vld [vmem:[#allocation11 + $0x118] sm:$0xff]
    %v1731 = vld [vmem:[#allocation11 + $0x120] sm:$0xff]
    %v1732 = vld [vmem:[#allocation11 + $0x128] sm:$0xff]
    %v1733 = vld [vmem:[#allocation11 + $0x130] sm:$0xff]
    %v1734 = vld [vmem:[#allocation11 + $0x138] sm:$0xff]
    %v1735 = vld [vmem:[#allocation11 + $0x140] sm:$0xff]
    %v1736 = vld [vmem:[#allocation11 + $0x148] sm:$0xff]
    %v1737 = vld [vmem:[#allocation11 + $0x150] sm:$0xff]
    %v1738 = vld [vmem:[#allocation11 + $0x158] sm:$0xff]
    %v1739 = vld [vmem:[#allocation11 + $0x160] sm:$0xff]
    %v1740 = vld [vmem:[#allocation11 + $0x168] sm:$0xff]
    %v1741 = vld [vmem:[#allocation11 + $0x170] sm:$0xff]
    %v1742 = vld [vmem:[#allocation11 + $0x178] sm:$0xff]
    %v1743 = vld [vmem:[#allocation11 + $0x180] sm:$0xff]
    %v1744 = vld [vmem:[#allocation11 + $0x188] sm:$0xff]
    %v1745 = vld [vmem:[#allocation11 + $0x190] sm:$0xff]
    %v1746 = vld [vmem:[#allocation11 + $0x198] sm:$0xff]
    %v1747 = vld [vmem:[#allocation11 + $0x1a0] sm:$0xff]
    %v1748 = vld [vmem:[#allocation11 + $0x1a8] sm:$0xff]
    %v1749 = vld [vmem:[#allocation11 + $0x1b0] sm:$0xff]
    %v1750 = vld [vmem:[#allocation11 + $0x1b8] sm:$0xff]
    %v1751 = vld [vmem:[#allocation11 + $0x1c0] sm:$0xff]
    %v1752 = vld [vmem:[#allocation11 + $0x1c8] sm:$0xff]
    %v1753 = vld [vmem:[#allocation11 + $0x1d0] sm:$0xff]
    %v1754 = vld [vmem:[#allocation11 + $0x1d8] sm:$0xff]
    %v1755 = vld [vmem:[#allocation11 + $0x1e0] sm:$0xff]
    %v1756 = vld [vmem:[#allocation11 + $0x1e8] sm:$0xff]
    %v1757 = vld [vmem:[#allocation11 + $0x1f0] sm:$0xff]
    %v1758 = vld [vmem:[#allocation11 + $0x1f8] sm:$0xff]
    %v1759 = vld [vmem:[#allocation13] sm:$0x1]
    %v1761 = vperm.slane %v1759, 0
    %1763 = vmatpush.msra.mxu0 %v1710
    %1764 = vmatpush.msra.mxu0 %v1709
    %1765 = vmatpush.msra.mxu0 %v1708
    %1766 = vmatpush.msra.mxu0 %v1707
    %1767 = vmatpush.msra.mxu0 %v1706
    %1768 = vmatpush.msra.mxu0 %v1705
    %1769 = vmatpush.msra.mxu0 %v1704
    %1770 = vmatpush.msra.mxu0 %v1703
    %1771 = vmatpush.msra.mxu0 %v1702
    %1772 = vmatpush.msra.mxu0 %v1701
    %1773 = vmatpush.msra.mxu0 %v1700
    %1774 = vmatpush.msra.mxu0 %v1699
    %1775 = vmatpush.msra.mxu0 %v1698
    %1776 = vmatpush.msra.mxu0 %v1697
    %1777 = vmatpush.msra.mxu0 %v1696
    %1778 = vmatpush.msra.mxu0 %v1695
    %1779 = vmatmul.f32.gmra.mxu0 %v1691
    %v1780 = vpop.f32.mrf.mxu0
    %v1781 = vadd.f32 %v1761, %v1780
    %1782 = vdwg.mxu0
    %1783 = vmatpush.msra.mxu0 %v1726
    %1784 = vmatpush.msra.mxu0 %v1725
    %1785 = vmatpush.msra.mxu0 %v1724
    %1786 = vmatpush.msra.mxu0 %v1723
    %1787 = vmatpush.msra.mxu0 %v1722
    %1788 = vmatpush.msra.mxu0 %v1721
    %1789 = vmatpush.msra.mxu0 %v1720
    %1790 = vmatpush.msra.mxu0 %v1719
    %1791 = vmatpush.msra.mxu0 %v1718
    %1792 = vmatpush.msra.mxu0 %v1717
    %1793 = vmatpush.msra.mxu0 %v1716
    %1794 = vmatpush.msra.mxu0 %v1715
    %1795 = vmatpush.msra.mxu0 %v1714
    %1796 = vmatpush.msra.mxu0 %v1713
    %1797 = vmatpush.msra.mxu0 %v1712
    %1798 = vmatpush.msra.mxu0 %v1711
    %1799 = vmatmul.f32.gmra.mxu0 %v1692
    %v1800 = vpop.f32.mrf.mxu0
    %v1801 = vadd.f32 %v1781, %v1800
    %1802 = vdwg.mxu0
    %1803 = vmatpush.msra.mxu0 %v1742
    %1804 = vmatpush.msra.mxu0 %v1741
    %1805 = vmatpush.msra.mxu0 %v1740
    %1806 = vmatpush.msra.mxu0 %v1739
    %1807 = vmatpush.msra.mxu0 %v1738
    %1808 = vmatpush.msra.mxu0 %v1737
    %1809 = vmatpush.msra.mxu0 %v1736
    %1810 = vmatpush.msra.mxu0 %v1735
    %1811 = vmatpush.msra.mxu0 %v1734
    %1812 = vmatpush.msra.mxu0 %v1733
    %1813 = vmatpush.msra.mxu0 %v1732
    %1814 = vmatpush.msra.mxu0 %v1731
    %1815 = vmatpush.msra.mxu0 %v1730
    %1816 = vmatpush.msra.mxu0 %v1729
    %1817 = vmatpush.msra.mxu0 %v1728
    %1818 = vmatpush.msra.mxu0 %v1727
    %1819 = vmatmul.f32.gmra.mxu0 %v1693
    %v1820 = vpop.f32.mrf.mxu0
    %v1821 = vadd.f32 %v1801, %v1820
    %1822 = vdwg.mxu0
    %1823 = vmatpush.msra.mxu0 %v1758
    %1824 = vmatpush.msra.mxu0 %v1757
    %1825 = vmatpush.msra.mxu0 %v1756
    %1826 = vmatpush.msra.mxu0 %v1755
    %1827 = vmatpush.msra.mxu0 %v1754
    %1828 = vmatpush.msra.mxu0 %v1753
    %1829 = vmatpush.msra.mxu0 %v1752
    %1830 = vmatpush.msra.mxu0 %v1751
    %1831 = vmatpush.msra.mxu0 %v1750
    %1832 = vmatpush.msra.mxu0 %v1749
    %1833 = vmatpush.msra.mxu0 %v1748
    %1834 = vmatpush.msra.mxu0 %v1747
    %1835 = vmatpush.msra.mxu0 %v1746
    %1836 = vmatpush.msra.mxu0 %v1745
    %1837 = vmatpush.msra.mxu0 %v1744
    %1838 = vmatpush.msra.mxu0 %v1743
    %1839 = vmatmul.f32.gmra.mxu0 %v1694
    %v1840 = vpop.f32.mrf.mxu0
    %v1841 = vadd.f32 %v1821, %v1840
    %1842 = vdwg.mxu0
    %1843 = vst [vmem:[#allocation14] sm:$0xff] %v1841
    // Predicated region
    $region58: #{tpu_custom_call.1} parent=1 // pred_check
      _
    $region59: #{tpu_custom_call.1} parent=1 // pred_check_branch
      %1845 = sbr.rel (0) target = $region61
    $region60: #{tpu_custom_call.1} parent=1 // pred_region
      %1847 = vsyncadd [#allocation4], 0
      %s1849 = sshll.u32 [#allocation14], 4
      %s1850 = int_to_ptr.vmem [resolvable:$true] %s1849
      %s1851 = sshll.u32 %s7, 4
      %s1852 = int_to_ptr.hbm [resolvable:$true] %s1851
      %1854 = dma.vmem_to_hbm [thread:$0]  %s1850, 128, %s1852, [#allocation4]
    $region61: #{tpu_custom_call.1} parent=1 // pred_fallthru
      _
    // Predicated region
    $region62: #{tpu_custom_call.1} parent=1 // pred_check
      _
    $region63: #{tpu_custom_call.1} parent=1 // pred_check_branch
      %1856 = sbr.rel (0) target = $region65
    $region64: #{tpu_custom_call.1} parent=1 // pred_region
      %1858 = dma.done [#allocation4], 128
    $region65: #{tpu_custom_call.1} parent=1 // pred_fallthru
      _
    %1859 = vsyncpa [#allocation3], 1
    %1860 = vsyncpa [#allocation6], 1
    %1861 = vsyncpa [#allocation9], 1
    %1862 = vsyncpa [#allocation12], 1
    %1863 = vsyncpa [#allocation4], 1

</llo_original>
